<compile_context>
chip_gen: v6e
topology: v6e:2x2x1
jax: 0.10.0
libtpu: 0.0.40
codegen_flags: <defaults>
</compile_context>

<pallas_src>
import math

import jax
import jax.numpy as jnp
from jax import lax
from jax.experimental import pallas as pl
from jax.experimental.pallas import tpu as pltpu

EPS = 1e-5
K = 5   # kernel_size (ZeroPad2d((2,2,2,2)) only preserves shape for K=5)
P = 2   # zero padding on each side of H and W


def make_resblock_kernel(N, H, W, C):
    WC = W * C
    NH = N * H
    inv_nhw = 1.0 / float(N * H * W)

    def kernel(x_ref, gamma_ref, beta_ref, w1_ref, b1_ref, w2_ref, b2_ref,
               m_ref, out_ref, pad_ref):
        # x_ref   : (N, H, W*C)
        # gamma/beta/b1/b2 : (1, W*C)   per-channel values tiled over W
        # w1/w2   : (K, W*C, W*C)       block-banded per-kh conv matrices
        # m_ref   : (W*C, W*C)          channel selector (i % C == j % C)
        # pad_ref : (N, H+2P, W*C)      scratch, zero rows give the H padding
        gamma = gamma_ref[...]
        beta = beta_ref[...]
        m = m_ref[...]

        def batchnorm(y):  # y: (NH, WC) -> normalized (NH, WC)
            s1 = jnp.sum(y, axis=0, keepdims=True)            # (1, WC)
            s2 = jnp.sum(y * y, axis=0, keepdims=True)        # (1, WC)
            stats = jnp.concatenate([s1, s2], axis=0)         # (2, WC)
            stats = jnp.dot(stats, m,
                            preferred_element_type=jnp.float32) * inv_nhw
            mean = stats[0:1, :]
            var = stats[1:2, :] - mean * mean                 # biased variance
            scale = gamma * lax.rsqrt(var + EPS)
            shift = beta - mean * scale
            return y * scale + shift

        def conv(w_ref, b_ref):
            acc = jnp.zeros((NH, WC), jnp.float32)
            for kh in range(K):                               # static unrolled
                rows = pad_ref[:, kh:kh + H, :].reshape(NH, WC)
                acc = acc + jnp.dot(rows, w_ref[kh],
                                    preferred_element_type=jnp.float32)
            return acc + b_ref[...]

        # zero the H-padding border once; only the interior is rewritten below
        pad_ref[...] = jnp.zeros_like(pad_ref)

        # --- stage 1: bn -> pad -> relu -> conv1 ---
        y = batchnorm(x_ref[...].reshape(NH, WC))
        pad_ref[:, P:P + H, :] = jnp.maximum(y, 0.0).reshape(N, H, WC)
        y = conv(w1_ref, b1_ref)

        # --- stage 2: bn (shared gamma/beta) -> pad -> relu -> conv2 ---
        y = batchnorm(y)
        pad_ref[:, P:P + H, :] = jnp.maximum(y, 0.0).reshape(N, H, WC)
        y = conv(w2_ref, b2_ref)

        # residual add (x re-read here, not held live across the conv stages)
        out_ref[...] = (x_ref[...] + y.reshape(N, H, WC)).astype(out_ref.dtype)

    return kernel


def _band_weights(w_oihw, W, C):
    """torch conv weight (Co, Ci, Kh, Kw) -> (K, W*C, W*C) block-banded mats.

    bands[kh, w_in*C + ci, w_out*C + co] = w[co, ci, kh, w_in - w_out + P]
    (zero where the kw tap falls outside [0, K), i.e. W zero-padding folded in).
    """
    wt = jnp.transpose(w_oihw.astype(jnp.float32), (2, 3, 1, 0))   # (Kh,Kw,Ci,Co)
    a = jnp.arange(W)[:, None, None]          # w_in
    b = jnp.arange(W)[None, :, None]          # w_out
    k = jnp.arange(K)[None, None, :]          # kw
    sel = (a - b + P == k).astype(jnp.float32)                     # (W, W, K)
    bands = jnp.einsum('abk,hkio->haibo', sel, wt)                 # (K,W,C,W,C)
    return bands.reshape(K, W * C, W * C)


def _prepare_block(p, W):
    C = p["gamma"].shape[0]
    WC = W * C
    tile = lambda v: jnp.tile(v.astype(jnp.float32), W).reshape(1, WC)
    idx = jnp.arange(WC)
    m = (idx[:, None] % C == idx[None, :] % C).astype(jnp.float32)
    return dict(gamma_t=tile(p["gamma"]), beta_t=tile(p["beta"]),
                b1_t=tile(p["b1"]), b2_t=tile(p["b2"]),
                B1=_band_weights(p["w1"], W, C),
                B2=_band_weights(p["w2"], W, C),
                M=m)


def resblock_pallas(x3, bp, W, C):
    N, H, WC = x3.shape
    kernel = make_resblock_kernel(N, H, W, C)
    vmem = pl.BlockSpec(memory_space=pltpu.MemorySpace.VMEM)
    # TODO(synk): for large N/H/C this single-grid-point, fully VMEM-resident
    # design must be tiled (grid over N / H-tiles with a 2-row halo, marked
    # "parallel" for v7x megacore) and BN turned into a two-pass reduction,
    # since the batch statistics couple every tile of the activation.
    return pl.pallas_call(
        kernel,
        out_shape=jax.ShapeDtypeStruct((N, H, WC), x3.dtype),
        in_specs=[vmem] * 8,
        out_specs=vmem,
        scratch_shapes=[pltpu.VMEM((N, H + 2 * P, WC), jnp.float32)],
        compiler_params=pltpu.CompilerParams(vmem_limit_bytes=64 * 1024 * 1024),
    )(x3, bp["gamma_t"], bp["beta_t"], bp["B1"], bp["b1_t"],
      bp["B2"], bp["b2_t"], bp["M"])


def resnet_forward(x_nchw, params):
    """ResNet.forward: loop over ResBlock layers. Input/output NCHW."""
    N, C, H, W = x_nchw.shape
    x = jnp.transpose(x_nchw, (0, 2, 3, 1)).reshape(N, H, W * C)  # lane-dense
    for p in params:
        bp = _prepare_block(p, W)
        x = resblock_pallas(x, bp, W, C)
    x = x.reshape(N, H, W, C)
    return jnp.transpose(x, (0, 3, 1, 2))                          # -> NCHW


# ---------------- pure-JAX reference (for correctness check) ----------------
def resblock_ref(x_nhwc, p):
    gamma, beta = p["gamma"], p["beta"]

    def bn(v):
        mean = jnp.mean(v, axis=(0, 1, 2), keepdims=True)
        var = jnp.mean((v - mean) ** 2, axis=(0, 1, 2), keepdims=True)
        return (v - mean) * lax.rsqrt(var + EPS) * gamma + beta

    def conv(v, w_oihw, b):
        w = jnp.transpose(w_oihw, (2, 3, 1, 0))  # HWIO
        return lax.conv_general_dilated(
            v, w, (1, 1), "VALID",
            dimension_numbers=("NHWC", "HWIO", "NHWC")) + b

    y = bn(x_nhwc)
    y = jnp.maximum(jnp.pad(y, ((0, 0), (P, P), (P, P), (0, 0))), 0.0)
    y = conv(y, p["w1"], p["b1"])
    y = bn(y)
    y = jnp.maximum(jnp.pad(y, ((0, 0), (P, P), (P, P), (0, 0))), 0.0)
    y = conv(y, p["w2"], p["b2"])
    return x_nhwc + y


if __name__ == "__main__":
    key = jax.random.PRNGKey(0)
    N, C, H, W = 2, 8, 16, 16  # W*C = 128 -> exactly one lane width

    ks = jax.random.split(key, 7)
    x = jax.random.normal(ks[0], (N, C, H, W), jnp.float32)

    fan_in = C * K * K
    bound = 1.0 / math.sqrt(fan_in)
    params = [{
        "gamma": 1.0 + 0.1 * jax.random.normal(ks[1], (C,), jnp.float32),
        "beta": 0.1 * jax.random.normal(ks[2], (C,), jnp.float32),
        "w1": jax.random.uniform(ks[3], (C, C, K, K), jnp.float32, -bound, bound),
        "b1": jax.random.uniform(ks[4], (C,), jnp.float32, -bound, bound),
        "w2": jax.random.uniform(ks[5], (C, C, K, K), jnp.float32, -bound, bound),
        "b2": jax.random.uniform(ks[6], (C,), jnp.float32, -bound, bound),
    }]

    out = jax.jit(resnet_forward)(x, params)
    out = jax.block_until_ready(out)
    assert out.shape == (N, C, H, W)

    # reference check (same math, XLA conv path)
    xr = jnp.transpose(x, (0, 2, 3, 1))
    for p in params:
        xr = resblock_ref(xr, p)
    ref = jnp.transpose(xr, (0, 3, 1, 2))
    max_err = float(jnp.max(jnp.abs(out - ref)))
    assert max_err < 1e-3, f"max abs err {max_err}"

    print("KERNEL_OK")
</pallas_src>

<mosaic_0001>
module attributes {stable_mosaic.version = 11 : i64} {
  func.func @kernel(%arg0: memref<2x16x128xf32, #tpu.memory_space<vmem>>, %arg1: memref<1x128xf32, #tpu.memory_space<vmem>>, %arg2: memref<1x128xf32, #tpu.memory_space<vmem>>, %arg3: memref<5x128x128xf32, #tpu.memory_space<vmem>>, %arg4: memref<1x128xf32, #tpu.memory_space<vmem>>, %arg5: memref<5x128x128xf32, #tpu.memory_space<vmem>>, %arg6: memref<1x128xf32, #tpu.memory_space<vmem>>, %arg7: memref<128x128xf32, #tpu.memory_space<vmem>>, %arg8: memref<2x16x128xf32, #tpu.memory_space<vmem>>, %arg9: memref<2x20x128xf32, #tpu.memory_space<vmem>>) attributes {dimension_semantics = [], scalar_prefetch = 0 : i64, scratch_operands = 1 : i64, tpu.core_type = #tpu.core_type<tc>} {
    %c0 = arith.constant 0 : index
    %c0_0 = arith.constant 0 : index
    %0 = vector.load %arg1[%c0, %c0_0] : memref<1x128xf32, #tpu.memory_space<vmem>>, vector<1x128xf32>
    %c0_1 = arith.constant 0 : index
    %c0_2 = arith.constant 0 : index
    %1 = vector.load %arg2[%c0_1, %c0_2] : memref<1x128xf32, #tpu.memory_space<vmem>>, vector<1x128xf32>
    %c0_3 = arith.constant 0 : index
    %c0_4 = arith.constant 0 : index
    %2 = vector.load %arg7[%c0_3, %c0_4] : memref<128x128xf32, #tpu.memory_space<vmem>>, vector<128x128xf32>
    %cst = arith.constant 0.000000e+00 : f32
    %3 = vector.broadcast %cst : f32 to vector<2x20x128xf32>
    %c0_5 = arith.constant 0 : index
    %c0_6 = arith.constant 0 : index
    %c0_7 = arith.constant 0 : index
    %4 = vector.load %arg9[%c0_5, %c0_6, %c0_7] : memref<2x20x128xf32, #tpu.memory_space<vmem>>, vector<2x20x128xf32>
    tpu.vector_store %arg9[%c0_5, %c0_6, %c0_7], %3 {strides = array<i32>} : memref<2x20x128xf32, #tpu.memory_space<vmem>>, vector<2x20x128xf32>,
    %c0_8 = arith.constant 0 : index
    %c0_9 = arith.constant 0 : index
    %c0_10 = arith.constant 0 : index
    %5 = vector.load %arg0[%c0_8, %c0_9, %c0_10] : memref<2x16x128xf32, #tpu.memory_space<vmem>>, vector<2x16x128xf32>
    %6 = vector.shape_cast %5 : vector<2x16x128xf32> to vector<32x128xf32>
    %cst_11 = arith.constant dense<0.000000e+00> : vector<128xf32>
    %7 = vector.multi_reduction <add>, %6, %cst_11 [0] : vector<32x128xf32> to vector<128xf32>
    %8 = vector.shape_cast %7 : vector<128xf32> to vector<1x128xf32>
    %9 = arith.mulf %6, %6 : vector<32x128xf32>
    %cst_12 = arith.constant dense<0.000000e+00> : vector<128xf32>
    %10 = vector.multi_reduction <add>, %9, %cst_12 [0] : vector<32x128xf32> to vector<128xf32>
    %11 = vector.shape_cast %10 : vector<128xf32> to vector<1x128xf32>
    %12 = tpu.concatenate %8, %11 in 0 : vector<1x128xf32>, vector<1x128xf32> -> vector<2x128xf32>
    %cst_13 = arith.constant dense<0.000000e+00> : vector<2x128xf32>
    %13 = tpu.matmul %12, %2, %cst_13 {dimension_numbers = #tpu.dot_dimension_numbers<[1], [0], [0], [1], [0, 0, 1, 1], [], []>} : vector<2x128xf32>, vector<128x128xf32>, vector<2x128xf32> -> vector<2x128xf32>
    %cst_14 = arith.constant 0.001953125 : f32
    %14 = vector.broadcast %cst_14 : f32 to vector<2x128xf32>
    %15 = arith.mulf %13, %14 : vector<2x128xf32>
    %16 = vector.extract_strided_slice %15 {offsets = [0, 0], sizes = [1, 128], strides = [1, 1]} : vector<2x128xf32> to vector<1x128xf32>
    %17 = vector.extract_strided_slice %15 {offsets = [1, 0], sizes = [1, 128], strides = [1, 1]} : vector<2x128xf32> to vector<1x128xf32>
    %18 = arith.mulf %16, %16 : vector<1x128xf32>
    %19 = arith.subf %17, %18 : vector<1x128xf32>
    %cst_15 = arith.constant 9.99999974E-6 : f32
    %20 = vector.broadcast %cst_15 : f32 to vector<1x128xf32>
    %21 = arith.addf %19, %20 : vector<1x128xf32>
    %22 = math.rsqrt %21 : vector<1x128xf32>
    %23 = arith.mulf %0, %22 : vector<1x128xf32>
    %24 = arith.mulf %16, %23 : vector<1x128xf32>
    %25 = arith.subf %1, %24 : vector<1x128xf32>
    %26 = vector.broadcast %23 : vector<1x128xf32> to vector<32x128xf32>
    %27 = arith.mulf %6, %26 : vector<32x128xf32>
    %28 = vector.broadcast %25 : vector<1x128xf32> to vector<32x128xf32>
    %29 = arith.addf %27, %28 : vector<32x128xf32>
    %cst_16 = arith.constant 0.000000e+00 : f32
    %30 = vector.broadcast %cst_16 : f32 to vector<32x128xf32>
    %31 = arith.maximumf %29, %30 : vector<32x128xf32>
    %32 = vector.shape_cast %31 : vector<32x128xf32> to vector<2x16x128xf32>
    %c0_17 = arith.constant 0 : index
    %c2 = arith.constant 2 : index
    %c0_18 = arith.constant 0 : index
    %33 = vector.load %arg9[%c0_17, %c2, %c0_18] : memref<2x20x128xf32, #tpu.memory_space<vmem>>, vector<2x16x128xf32>
    tpu.vector_store %arg9[%c0_17, %c2, %c0_18], %32 {strides = array<i32>} : memref<2x20x128xf32, #tpu.memory_space<vmem>>, vector<2x16x128xf32>,
    %cst_19 = arith.constant 0.000000e+00 : f32
    %34 = vector.broadcast %cst_19 : f32 to vector<32x128xf32>
    %c0_20 = arith.constant 0 : index
    %c0_21 = arith.constant 0 : index
    %c0_22 = arith.constant 0 : index
    %35 = vector.load %arg9[%c0_20, %c0_21, %c0_22] : memref<2x20x128xf32, #tpu.memory_space<vmem>>, vector<2x16x128xf32>
    %36 = vector.shape_cast %35 : vector<2x16x128xf32> to vector<32x128xf32>
    %c0_23 = arith.constant 0 : index
    %c0_24 = arith.constant 0 : index
    %c0_25 = arith.constant 0 : index
    %37 = vector.load %arg3[%c0_23, %c0_24, %c0_25] : memref<5x128x128xf32, #tpu.memory_space<vmem>>, vector<1x128x128xf32>
    %38 = vector.shape_cast %37 : vector<1x128x128xf32> to vector<128x128xf32>
    %cst_26 = arith.constant dense<0.000000e+00> : vector<32x128xf32>
    %39 = tpu.matmul %36, %38, %cst_26 {dimension_numbers = #tpu.dot_dimension_numbers<[1], [0], [0], [1], [0, 0, 1, 1], [], []>} : vector<32x128xf32>, vector<128x128xf32>, vector<32x128xf32> -> vector<32x128xf32>
    %40 = arith.addf %34, %39 : vector<32x128xf32>
    %c0_27 = arith.constant 0 : index
    %c1 = arith.constant 1 : index
    %c0_28 = arith.constant 0 : index
    %41 = vector.load %arg9[%c0_27, %c1, %c0_28] : memref<2x20x128xf32, #tpu.memory_space<vmem>>, vector<2x16x128xf32>
    %42 = vector.shape_cast %41 : vector<2x16x128xf32> to vector<32x128xf32>
    %c1_29 = arith.constant 1 : index
    %c0_30 = arith.constant 0 : index
    %c0_31 = arith.constant 0 : index
    %43 = vector.load %arg3[%c1_29, %c0_30, %c0_31] : memref<5x128x128xf32, #tpu.memory_space<vmem>>, vector<1x128x128xf32>
    %44 = vector.shape_cast %43 : vector<1x128x128xf32> to vector<128x128xf32>
    %cst_32 = arith.constant dense<0.000000e+00> : vector<32x128xf32>
    %45 = tpu.matmul %42, %44, %cst_32 {dimension_numbers = #tpu.dot_dimension_numbers<[1], [0], [0], [1], [0, 0, 1, 1], [], []>} : vector<32x128xf32>, vector<128x128xf32>, vector<32x128xf32> -> vector<32x128xf32>
    %46 = arith.addf %40, %45 : vector<32x128xf32>
    %c0_33 = arith.constant 0 : index
    %c2_34 = arith.constant 2 : index
    %c0_35 = arith.constant 0 : index
    %47 = vector.load %arg9[%c0_33, %c2_34, %c0_35] : memref<2x20x128xf32, #tpu.memory_space<vmem>>, vector<2x16x128xf32>
    %48 = vector.shape_cast %47 : vector<2x16x128xf32> to vector<32x128xf32>
    %c2_36 = arith.constant 2 : index
    %c0_37 = arith.constant 0 : index
    %c0_38 = arith.constant 0 : index
    %49 = vector.load %arg3[%c2_36, %c0_37, %c0_38] : memref<5x128x128xf32, #tpu.memory_space<vmem>>, vector<1x128x128xf32>
    %50 = vector.shape_cast %49 : vector<1x128x128xf32> to vector<128x128xf32>
    %cst_39 = arith.constant dense<0.000000e+00> : vector<32x128xf32>
    %51 = tpu.matmul %48, %50, %cst_39 {dimension_numbers = #tpu.dot_dimension_numbers<[1], [0], [0], [1], [0, 0, 1, 1], [], []>} : vector<32x128xf32>, vector<128x128xf32>, vector<32x128xf32> -> vector<32x128xf32>
    %52 = arith.addf %46, %51 : vector<32x128xf32>
    %c0_40 = arith.constant 0 : index
    %c3 = arith.constant 3 : index
    %c0_41 = arith.constant 0 : index
    %53 = vector.load %arg9[%c0_40, %c3, %c0_41] : memref<2x20x128xf32, #tpu.memory_space<vmem>>, vector<2x16x128xf32>
    %54 = vector.shape_cast %53 : vector<2x16x128xf32> to vector<32x128xf32>
    %c3_42 = arith.constant 3 : index
    %c0_43 = arith.constant 0 : index
    %c0_44 = arith.constant 0 : index
    %55 = vector.load %arg3[%c3_42, %c0_43, %c0_44] : memref<5x128x128xf32, #tpu.memory_space<vmem>>, vector<1x128x128xf32>
    %56 = vector.shape_cast %55 : vector<1x128x128xf32> to vector<128x128xf32>
    %cst_45 = arith.constant dense<0.000000e+00> : vector<32x128xf32>
    %57 = tpu.matmul %54, %56, %cst_45 {dimension_numbers = #tpu.dot_dimension_numbers<[1], [0], [0], [1], [0, 0, 1, 1], [], []>} : vector<32x128xf32>, vector<128x128xf32>, vector<32x128xf32> -> vector<32x128xf32>
    %58 = arith.addf %52, %57 : vector<32x128xf32>
    %c0_46 = arith.constant 0 : index
    %c4 = arith.constant 4 : index
    %c0_47 = arith.constant 0 : index
    %59 = vector.load %arg9[%c0_46, %c4, %c0_47] : memref<2x20x128xf32, #tpu.memory_space<vmem>>, vector<2x16x128xf32>
    %60 = vector.shape_cast %59 : vector<2x16x128xf32> to vector<32x128xf32>
    %c4_48 = arith.constant 4 : index
    %c0_49 = arith.constant 0 : index
    %c0_50 = arith.constant 0 : index
    %61 = vector.load %arg3[%c4_48, %c0_49, %c0_50] : memref<5x128x128xf32, #tpu.memory_space<vmem>>, vector<1x128x128xf32>
    %62 = vector.shape_cast %61 : vector<1x128x128xf32> to vector<128x128xf32>
    %cst_51 = arith.constant dense<0.000000e+00> : vector<32x128xf32>
    %63 = tpu.matmul %60, %62, %cst_51 {dimension_numbers = #tpu.dot_dimension_numbers<[1], [0], [0], [1], [0, 0, 1, 1], [], []>} : vector<32x128xf32>, vector<128x128xf32>, vector<32x128xf32> -> vector<32x128xf32>
    %64 = arith.addf %58, %63 : vector<32x128xf32>
    %c0_52 = arith.constant 0 : index
    %c0_53 = arith.constant 0 : index
    %65 = vector.load %arg4[%c0_52, %c0_53] : memref<1x128xf32, #tpu.memory_space<vmem>>, vector<1x128xf32>
    %66 = vector.broadcast %65 : vector<1x128xf32> to vector<32x128xf32>
    %67 = arith.addf %64, %66 : vector<32x128xf32>
    %cst_54 = arith.constant dense<0.000000e+00> : vector<128xf32>
    %68 = vector.multi_reduction <add>, %67, %cst_54 [0] : vector<32x128xf32> to vector<128xf32>
    %69 = vector.shape_cast %68 : vector<128xf32> to vector<1x128xf32>
    %70 = arith.mulf %67, %67 : vector<32x128xf32>
    %cst_55 = arith.constant dense<0.000000e+00> : vector<128xf32>
    %71 = vector.multi_reduction <add>, %70, %cst_55 [0] : vector<32x128xf32> to vector<128xf32>
    %72 = vector.shape_cast %71 : vector<128xf32> to vector<1x128xf32>
    %73 = tpu.concatenate %69, %72 in 0 : vector<1x128xf32>, vector<1x128xf32> -> vector<2x128xf32>
    %cst_56 = arith.constant dense<0.000000e+00> : vector<2x128xf32>
    %74 = tpu.matmul %73, %2, %cst_56 {dimension_numbers = #tpu.dot_dimension_numbers<[1], [0], [0], [1], [0, 0, 1, 1], [], []>} : vector<2x128xf32>, vector<128x128xf32>, vector<2x128xf32> -> vector<2x128xf32>
    %cst_57 = arith.constant 0.001953125 : f32
    %75 = vector.broadcast %cst_57 : f32 to vector<2x128xf32>
    %76 = arith.mulf %74, %75 : vector<2x128xf32>
    %77 = vector.extract_strided_slice %76 {offsets = [0, 0], sizes = [1, 128], strides = [1, 1]} : vector<2x128xf32> to vector<1x128xf32>
    %78 = vector.extract_strided_slice %76 {offsets = [1, 0], sizes = [1, 128], strides = [1, 1]} : vector<2x128xf32> to vector<1x128xf32>
    %79 = arith.mulf %77, %77 : vector<1x128xf32>
    %80 = arith.subf %78, %79 : vector<1x128xf32>
    %cst_58 = arith.constant 9.99999974E-6 : f32
    %81 = vector.broadcast %cst_58 : f32 to vector<1x128xf32>
    %82 = arith.addf %80, %81 : vector<1x128xf32>
    %83 = math.rsqrt %82 : vector<1x128xf32>
    %84 = arith.mulf %0, %83 : vector<1x128xf32>
    %85 = arith.mulf %77, %84 : vector<1x128xf32>
    %86 = arith.subf %1, %85 : vector<1x128xf32>
    %87 = vector.broadcast %84 : vector<1x128xf32> to vector<32x128xf32>
    %88 = arith.mulf %67, %87 : vector<32x128xf32>
    %89 = vector.broadcast %86 : vector<1x128xf32> to vector<32x128xf32>
    %90 = arith.addf %88, %89 : vector<32x128xf32>
    %cst_59 = arith.constant 0.000000e+00 : f32
    %91 = vector.broadcast %cst_59 : f32 to vector<32x128xf32>
    %92 = arith.maximumf %90, %91 : vector<32x128xf32>
    %93 = vector.shape_cast %92 : vector<32x128xf32> to vector<2x16x128xf32>
    %c0_60 = arith.constant 0 : index
    %c2_61 = arith.constant 2 : index
    %c0_62 = arith.constant 0 : index
    %94 = vector.load %arg9[%c0_60, %c2_61, %c0_62] : memref<2x20x128xf32, #tpu.memory_space<vmem>>, vector<2x16x128xf32>
    tpu.vector_store %arg9[%c0_60, %c2_61, %c0_62], %93 {strides = array<i32>} : memref<2x20x128xf32, #tpu.memory_space<vmem>>, vector<2x16x128xf32>,
    %cst_63 = arith.constant 0.000000e+00 : f32
    %95 = vector.broadcast %cst_63 : f32 to vector<32x128xf32>
    %c0_64 = arith.constant 0 : index
    %c0_65 = arith.constant 0 : index
    %c0_66 = arith.constant 0 : index
    %96 = vector.load %arg9[%c0_64, %c0_65, %c0_66] : memref<2x20x128xf32, #tpu.memory_space<vmem>>, vector<2x16x128xf32>
    %97 = vector.shape_cast %96 : vector<2x16x128xf32> to vector<32x128xf32>
    %c0_67 = arith.constant 0 : index
    %c0_68 = arith.constant 0 : index
    %c0_69 = arith.constant 0 : index
    %98 = vector.load %arg5[%c0_67, %c0_68, %c0_69] : memref<5x128x128xf32, #tpu.memory_space<vmem>>, vector<1x128x128xf32>
    %99 = vector.shape_cast %98 : vector<1x128x128xf32> to vector<128x128xf32>
    %cst_70 = arith.constant dense<0.000000e+00> : vector<32x128xf32>
    %100 = tpu.matmul %97, %99, %cst_70 {dimension_numbers = #tpu.dot_dimension_numbers<[1], [0], [0], [1], [0, 0, 1, 1], [], []>} : vector<32x128xf32>, vector<128x128xf32>, vector<32x128xf32> -> vector<32x128xf32>
    %101 = arith.addf %95, %100 : vector<32x128xf32>
    %c0_71 = arith.constant 0 : index
    %c1_72 = arith.constant 1 : index
    %c0_73 = arith.constant 0 : index
    %102 = vector.load %arg9[%c0_71, %c1_72, %c0_73] : memref<2x20x128xf32, #tpu.memory_space<vmem>>, vector<2x16x128xf32>
    %103 = vector.shape_cast %102 : vector<2x16x128xf32> to vector<32x128xf32>
    %c1_74 = arith.constant 1 : index
    %c0_75 = arith.constant 0 : index
    %c0_76 = arith.constant 0 : index
    %104 = vector.load %arg5[%c1_74, %c0_75, %c0_76] : memref<5x128x128xf32, #tpu.memory_space<vmem>>, vector<1x128x128xf32>
    %105 = vector.shape_cast %104 : vector<1x128x128xf32> to vector<128x128xf32>
    %cst_77 = arith.constant dense<0.000000e+00> : vector<32x128xf32>
    %106 = tpu.matmul %103, %105, %cst_77 {dimension_numbers = #tpu.dot_dimension_numbers<[1], [0], [0], [1], [0, 0, 1, 1], [], []>} : vector<32x128xf32>, vector<128x128xf32>, vector<32x128xf32> -> vector<32x128xf32>
    %107 = arith.addf %101, %106 : vector<32x128xf32>
    %c0_78 = arith.constant 0 : index
    %c2_79 = arith.constant 2 : index
    %c0_80 = arith.constant 0 : index
    %108 = vector.load %arg9[%c0_78, %c2_79, %c0_80] : memref<2x20x128xf32, #tpu.memory_space<vmem>>, vector<2x16x128xf32>
    %109 = vector.shape_cast %108 : vector<2x16x128xf32> to vector<32x128xf32>
    %c2_81 = arith.constant 2 : index
    %c0_82 = arith.constant 0 : index
    %c0_83 = arith.constant 0 : index
    %110 = vector.load %arg5[%c2_81, %c0_82, %c0_83] : memref<5x128x128xf32, #tpu.memory_space<vmem>>, vector<1x128x128xf32>
    %111 = vector.shape_cast %110 : vector<1x128x128xf32> to vector<128x128xf32>
    %cst_84 = arith.constant dense<0.000000e+00> : vector<32x128xf32>
    %112 = tpu.matmul %109, %111, %cst_84 {dimension_numbers = #tpu.dot_dimension_numbers<[1], [0], [0], [1], [0, 0, 1, 1], [], []>} : vector<32x128xf32>, vector<128x128xf32>, vector<32x128xf32> -> vector<32x128xf32>
    %113 = arith.addf %107, %112 : vector<32x128xf32>
    %c0_85 = arith.constant 0 : index
    %c3_86 = arith.constant 3 : index
    %c0_87 = arith.constant 0 : index
    %114 = vector.load %arg9[%c0_85, %c3_86, %c0_87] : memref<2x20x128xf32, #tpu.memory_space<vmem>>, vector<2x16x128xf32>
    %115 = vector.shape_cast %114 : vector<2x16x128xf32> to vector<32x128xf32>
    %c3_88 = arith.constant 3 : index
    %c0_89 = arith.constant 0 : index
    %c0_90 = arith.constant 0 : index
    %116 = vector.load %arg5[%c3_88, %c0_89, %c0_90] : memref<5x128x128xf32, #tpu.memory_space<vmem>>, vector<1x128x128xf32>
    %117 = vector.shape_cast %116 : vector<1x128x128xf32> to vector<128x128xf32>
    %cst_91 = arith.constant dense<0.000000e+00> : vector<32x128xf32>
    %118 = tpu.matmul %115, %117, %cst_91 {dimension_numbers = #tpu.dot_dimension_numbers<[1], [0], [0], [1], [0, 0, 1, 1], [], []>} : vector<32x128xf32>, vector<128x128xf32>, vector<32x128xf32> -> vector<32x128xf32>
    %119 = arith.addf %113, %118 : vector<32x128xf32>
    %c0_92 = arith.constant 0 : index
    %c4_93 = arith.constant 4 : index
    %c0_94 = arith.constant 0 : index
    %120 = vector.load %arg9[%c0_92, %c4_93, %c0_94] : memref<2x20x128xf32, #tpu.memory_space<vmem>>, vector<2x16x128xf32>
    %121 = vector.shape_cast %120 : vector<2x16x128xf32> to vector<32x128xf32>
    %c4_95 = arith.constant 4 : index
    %c0_96 = arith.constant 0 : index
    %c0_97 = arith.constant 0 : index
    %122 = vector.load %arg5[%c4_95, %c0_96, %c0_97] : memref<5x128x128xf32, #tpu.memory_space<vmem>>, vector<1x128x128xf32>
    %123 = vector.shape_cast %122 : vector<1x128x128xf32> to vector<128x128xf32>
    %cst_98 = arith.constant dense<0.000000e+00> : vector<32x128xf32>
    %124 = tpu.matmul %121, %123, %cst_98 {dimension_numbers = #tpu.dot_dimension_numbers<[1], [0], [0], [1], [0, 0, 1, 1], [], []>} : vector<32x128xf32>, vector<128x128xf32>, vector<32x128xf32> -> vector<32x128xf32>
    %125 = arith.addf %119, %124 : vector<32x128xf32>
    %c0_99 = arith.constant 0 : index
    %c0_100 = arith.constant 0 : index
    %126 = vector.load %arg6[%c0_99, %c0_100] : memref<1x128xf32, #tpu.memory_space<vmem>>, vector<1x128xf32>
    %127 = vector.broadcast %126 : vector<1x128xf32> to vector<32x128xf32>
    %128 = arith.addf %125, %127 : vector<32x128xf32>
    %c0_101 = arith.constant 0 : index
    %c0_102 = arith.constant 0 : index
    %c0_103 = arith.constant 0 : index
    %129 = vector.load %arg0[%c0_101, %c0_102, %c0_103] : memref<2x16x128xf32, #tpu.memory_space<vmem>>, vector<2x16x128xf32>
    %130 = vector.shape_cast %128 : vector<32x128xf32> to vector<2x16x128xf32>
    %131 = arith.addf %129, %130 : vector<2x16x128xf32>
    %c0_104 = arith.constant 0 : index
    %c0_105 = arith.constant 0 : index
    %c0_106 = arith.constant 0 : index
    %132 = vector.load %arg8[%c0_104, %c0_105, %c0_106] : memref<2x16x128xf32, #tpu.memory_space<vmem>>, vector<2x16x128xf32>
    tpu.vector_store %arg8[%c0_104, %c0_105, %c0_106], %131 {strides = array<i32>} : memref<2x16x128xf32, #tpu.memory_space<vmem>>, vector<2x16x128xf32>,
    return
  }
}

</mosaic_0001>

<llo_original>
// kernel: tile.23
$region0: #{tile.23}
  #allocation0 [shape = 's32[1]{0}', space=sflag, size = 0x4, scoped, tag = 'scoped memory for tile.23']
  %s0 = inlined_call_operand.vmem [shape: f32[8], index: 0, kind: input, shape index: {}]
  %s1 = inlined_call_operand.vmem [shape: f32[16,8], index: 1, kind: output, shape index: {}]
  // Predicated region
  $region2: #{tile.23} parent=0 // pred_check
    _
  $region3: #{tile.23} parent=0 // pred_check_branch
    %3 = sbr.rel (0) target = $region5
  $region4: #{tile.23} parent=0 // pred_region
    _
  $region5: #{tile.23} parent=0 // pred_fallthru
    _
  %v4 = vld [vmem:[%s0] ss:$0 sm:$0xff]
  %5 = vst [vmem:[%s1] sm:$0xff] %v4
  %s6 = scalar_lea.vmem %s1, 8
  %7 = vst [vmem:[%s6] sm:$0xff] %v4

// kernel: tile.24
$region0: #{tile.24}
  %s0 = inlined_call_operand.vmem [shape: f32[16,8], index: 0, kind: input, shape index: {}]
  %s1 = inlined_call_operand.vmem [shape: f32[1,128], index: 1, kind: output, shape index: {}]
  $region1: #{tile.24} parent=0
    #allocation0 [shape = 'u8[4096]{0}', space=vmem, size = 0x1000, scoped, tag = 'scoped mem for output reshape']
    %v2 = vld [vmem:[%s0] sm:$0x1]
    %vm3 = vcmask 64512
    %4 = vst.msk [vmem:[#allocation0] sm:$0x1] %vm3, %v2
    %s5 = scalar_lea.vmem %s0, 15
    %v6 = vld [vmem:[%s5] sm:$0x1]
    %7 = vrot.lane.b32.xlu0 %v6, 120
    %v8 = vpop.permute.xlu0 %7
    %vm9 = vcmask 1048512
    %10 = vst.msk [vmem:[#allocation0] sm:$0x1] %vm9, %v8
    %s11 = scalar_lea.vmem %s0, 14
    %v12 = vld [vmem:[%s11] sm:$0x1]
    %13 = vrot.lane.b32.xlu0 %v12, 112
    %v14 = vpop.permute.xlu0 %13
    %vm15 = vcmask 982912
    %16 = vst.msk [vmem:[#allocation0] sm:$0x1] %vm15, %v14
    %s17 = scalar_lea.vmem %s0, 13
    %v18 = vld [vmem:[%s17] sm:$0x1]
    %19 = vrot.lane.b32.xlu0 %v18, 104
    %v20 = vpop.permute.xlu0 %19
    %vm21 = vcmask 917312
    %22 = vst.msk [vmem:[#allocation0] sm:$0x1] %vm21, %v20
    %s23 = scalar_lea.vmem %s0, 12
    %v24 = vld [vmem:[%s23] sm:$0x1]
    %25 = vrot.lane.b32.xlu0 %v24, 96
    %v26 = vpop.permute.xlu0 %25
    %vm27 = vcmask 851712
    %28 = vst.msk [vmem:[#allocation0] sm:$0x1] %vm27, %v26
    %s29 = scalar_lea.vmem %s0, 11
    %v30 = vld [vmem:[%s29] sm:$0x1]
    %31 = vrot.lane.b32.xlu0 %v30, 88
    %v32 = vpop.permute.xlu0 %31
    %vm33 = vcmask 786112
    %34 = vst.msk [vmem:[#allocation0] sm:$0x1] %vm33, %v32
    %s35 = scalar_lea.vmem %s0, 10
    %v36 = vld [vmem:[%s35] sm:$0x1]
    %37 = vrot.lane.b32.xlu0 %v36, 80
    %v38 = vpop.permute.xlu0 %37
    %vm39 = vcmask 720512
    %40 = vst.msk [vmem:[#allocation0] sm:$0x1] %vm39, %v38
    %s41 = scalar_lea.vmem %s0, 9
    %v42 = vld [vmem:[%s41] sm:$0x1]
    %43 = vrot.lane.b32.xlu0 %v42, 72
    %v44 = vpop.permute.xlu0 %43
    %vm45 = vcmask 654912
    %46 = vst.msk [vmem:[#allocation0] sm:$0x1] %vm45, %v44
    %s47 = scalar_lea.vmem %s0, 8
    %v48 = vld [vmem:[%s47] sm:$0x1]
    %49 = vrot.lane.b32.xlu0 %v48, 64
    %v50 = vpop.permute.xlu0 %49
    %vm51 = vcmask 589312
    %52 = vst.msk [vmem:[#allocation0] sm:$0x1] %vm51, %v50
    %s53 = scalar_lea.vmem %s0, 7
    %v54 = vld [vmem:[%s53] sm:$0x1]
    %55 = vrot.lane.b32.xlu0 %v54, 56
    %v56 = vpop.permute.xlu0 %55
    %vm57 = vcmask 523712
    %58 = vst.msk [vmem:[#allocation0] sm:$0x1] %vm57, %v56
    %s59 = scalar_lea.vmem %s0, 6
    %v60 = vld [vmem:[%s59] sm:$0x1]
    %61 = vrot.lane.b32.xlu0 %v60, 48
    %v62 = vpop.permute.xlu0 %61
    %vm63 = vcmask 458112
    %64 = vst.msk [vmem:[#allocation0] sm:$0x1] %vm63, %v62
    %s65 = scalar_lea.vmem %s0, 5
    %v66 = vld [vmem:[%s65] sm:$0x1]
    %67 = vrot.lane.b32.xlu0 %v66, 40
    %v68 = vpop.permute.xlu0 %67
    %vm69 = vcmask 392512
    %70 = vst.msk [vmem:[#allocation0] sm:$0x1] %vm69, %v68
    %s71 = scalar_lea.vmem %s0, 4
    %v72 = vld [vmem:[%s71] sm:$0x1]
    %73 = vrot.lane.b32.xlu0 %v72, 32
    %v74 = vpop.permute.xlu0 %73
    %vm75 = vcmask 326912
    %76 = vst.msk [vmem:[#allocation0] sm:$0x1] %vm75, %v74
    %s77 = scalar_lea.vmem %s0, 3
    %v78 = vld [vmem:[%s77] sm:$0x1]
    %79 = vrot.lane.b32.xlu0 %v78, 24
    %v80 = vpop.permute.xlu0 %79
    %vm81 = vcmask 261312
    %82 = vst.msk [vmem:[#allocation0] sm:$0x1] %vm81, %v80
    %s83 = scalar_lea.vmem %s0, 2
    %v84 = vld [vmem:[%s83] sm:$0x1]
    %85 = vrot.lane.b32.xlu0 %v84, 16
    %v86 = vpop.permute.xlu0 %85
    %vm87 = vcmask 195712
    %88 = vst.msk [vmem:[#allocation0] sm:$0x1] %vm87, %v86
    %s89 = scalar_lea.vmem %s0, 1
    %v90 = vld [vmem:[%s89] sm:$0x1]
    %91 = vrot.lane.b32.xlu0 %v90, 8
    %v92 = vpop.permute.xlu0 %91
    %vm93 = vcmask 130112
    %94 = vst.msk [vmem:[#allocation0] sm:$0x1] %vm93, %v92
    %s96 = sshll.u32 1, 1
    %s97 = ssub.s32 %s96, 1
    %v99 = vld [vmem:[#allocation0] sm:%s97]
    %s100 = sshll.u32 1, 1
    %s101 = ssub.s32 %s100, 1
    %102 = vst [vmem:[%s1] sm:%s101] %v99

// kernel: resnet_forward.1
$region0: #{resnet_forward.1}
  #allocation0 [shape = 'u32[]', space=smem, size = 0x4, offset = 0x4, fixed_abs, tag = 'smem constant byte address 0x4 - core index']
  #allocation1 [shape = 'u32[144,128]{1,0:T(1,128)}', space=vmem, size = 0x12000, scoped, tag = 'internal scratch']
  #allocation2 [shape = 'f32[2,20,128]{2,1,0:T(8,128)}', space=vmem, size = 0x6000, scoped, tag = 'scratch operand']
  %s0 = inlined_call_operand.vmem [shape: f32[2,16,128], index: 0, kind: input, shape index: {}]
  %s1 = inlined_call_operand.vmem [shape: f32[1,128], index: 1, kind: input, shape index: {}]
  %s2 = inlined_call_operand.vmem [shape: f32[1,128], index: 2, kind: input, shape index: {}]
  %s3 = inlined_call_operand.vmem [shape: f32[5,128,128], index: 3, kind: input, shape index: {}]
  %s4 = inlined_call_operand.vmem [shape: f32[1,128], index: 4, kind: input, shape index: {}]
  %s5 = inlined_call_operand.vmem [shape: f32[5,128,128], index: 5, kind: input, shape index: {}]
  %s6 = inlined_call_operand.vmem [shape: f32[1,128], index: 6, kind: input, shape index: {}]
  %s7 = inlined_call_operand.vmem [shape: f32[128,128], index: 7, kind: input, shape index: {}]
  %s8 = inlined_call_operand.vmem [shape: f32[2,16,128], index: 8, kind: output, shape index: {}]
  %s9 = sld [smem:[#allocation0]]
  $region42: #{resnet_forward.1} parent=0
    _
  %s11 = ssub.s32 1, %s9
  %s12 = scalar_select 0, %s11, %s9
  // Predicated region
  $region2: #{resnet_forward.1} parent=0 // pred_check
    _
  $region3: #{resnet_forward.1} parent=0 // pred_check_branch
    %14 = sbr.rel (0) target = $region5
  $region4: #{resnet_forward.1} parent=0 // pred_region
    _
  $region5: #{resnet_forward.1} parent=0 // pred_fallthru
    _
  // Predicated region
  $region6: #{resnet_forward.1} parent=0 // pred_check
    _
  $region7: #{resnet_forward.1} parent=0 // pred_check_branch
    %16 = sbr.rel (0) target = $region9
  $region8: #{resnet_forward.1} parent=0 // pred_region
    _
  $region9: #{resnet_forward.1} parent=0 // pred_fallthru
    _
  // Predicated region
  $region10: #{resnet_forward.1} parent=0 // pred_check
    _
  $region11: #{resnet_forward.1} parent=0 // pred_check_branch
    %18 = sbr.rel (0) target = $region13
  $region12: #{resnet_forward.1} parent=0 // pred_region
    _
  $region13: #{resnet_forward.1} parent=0 // pred_fallthru
    _
  // Predicated region
  $region14: #{resnet_forward.1} parent=0 // pred_check
    _
  $region15: #{resnet_forward.1} parent=0 // pred_check_branch
    %20 = sbr.rel (0) target = $region17
  $region16: #{resnet_forward.1} parent=0 // pred_region
    _
  $region17: #{resnet_forward.1} parent=0 // pred_fallthru
    _
  // Predicated region
  $region18: #{resnet_forward.1} parent=0 // pred_check
    _
  $region19: #{resnet_forward.1} parent=0 // pred_check_branch
    %22 = sbr.rel (0) target = $region21
  $region20: #{resnet_forward.1} parent=0 // pred_region
    _
  $region21: #{resnet_forward.1} parent=0 // pred_fallthru
    _
  // Predicated region
  $region22: #{resnet_forward.1} parent=0 // pred_check
    _
  $region23: #{resnet_forward.1} parent=0 // pred_check_branch
    %24 = sbr.rel (0) target = $region25
  $region24: #{resnet_forward.1} parent=0 // pred_region
    _
  $region25: #{resnet_forward.1} parent=0 // pred_fallthru
    _
  // Predicated region
  $region26: #{resnet_forward.1} parent=0 // pred_check
    _
  $region27: #{resnet_forward.1} parent=0 // pred_check_branch
    %26 = sbr.rel (0) target = $region29
  $region28: #{resnet_forward.1} parent=0 // pred_region
    _
  $region29: #{resnet_forward.1} parent=0 // pred_fallthru
    _
  // Predicated region
  $region30: #{resnet_forward.1} parent=0 // pred_check
    _
  $region31: #{resnet_forward.1} parent=0 // pred_check_branch
    %28 = sbr.rel (0) target = $region33
  $region32: #{resnet_forward.1} parent=0 // pred_region
    _
  $region33: #{resnet_forward.1} parent=0 // pred_fallthru
    _
  %v29 = vld [vmem:[%s1] sm:$0x1]
  %v30 = vld [vmem:[%s2] sm:$0x1]
  %v31 = vld [vmem:[%s7] sm:$0xff]
  %v32 = vld [vmem:[%s7 + $0x8] sm:$0xff]
  %v33 = vld [vmem:[%s7 + $0x10] sm:$0xff]
  %v34 = vld [vmem:[%s7 + $0x18] sm:$0xff]
  %v35 = vld [vmem:[%s7 + $0x20] sm:$0xff]
  %v36 = vld [vmem:[%s7 + $0x28] sm:$0xff]
  %v37 = vld [vmem:[%s7 + $0x30] sm:$0xff]
  %v38 = vld [vmem:[%s7 + $0x38] sm:$0xff]
  %v39 = vld [vmem:[%s7 + $0x40] sm:$0xff]
  %v40 = vld [vmem:[%s7 + $0x48] sm:$0xff]
  %v41 = vld [vmem:[%s7 + $0x50] sm:$0xff]
  %v42 = vld [vmem:[%s7 + $0x58] sm:$0xff]
  %v43 = vld [vmem:[%s7 + $0x60] sm:$0xff]
  %v44 = vld [vmem:[%s7 + $0x68] sm:$0xff]
  %v45 = vld [vmem:[%s7 + $0x70] sm:$0xff]
  %v46 = vld [vmem:[%s7 + $0x78] sm:$0xff]
  %47 = vst [vmem:[#allocation2] sm:$0xff] 0.0
  %48 = vst [vmem:[#allocation2 + $0x8] sm:$0xff] 0.0
  %49 = vst [vmem:[#allocation2 + $0x10] sm:$0xf] 0.0
  %50 = vst [vmem:[#allocation2 + $0x18] sm:$0xff] 0.0
  %51 = vst [vmem:[#allocation2 + $0x20] sm:$0xff] 0.0
  %52 = vst [vmem:[#allocation2 + $0x28] sm:$0xf] 0.0
  %v53 = vld [vmem:[%s0] sm:$0xff]
  %v54 = vld [vmem:[%s0 + $0x8] sm:$0xff]
  %v55 = vld [vmem:[%s0 + $0x10] sm:$0xff]
  %v56 = vld [vmem:[%s0 + $0x18] sm:$0xff]
  %v57 = vadd.f32 %v53, %v54
  %v58 = vadd.f32 %v57, %v55
  %v59 = vadd.f32 %v58, %v56
  %v60 = vrot.slane %v59, 4
  %v61 = vadd.f32 %v59, %v60
  %v62 = vrot.slane %v61, 2
  %v63 = vadd.f32 %v61, %v62
  %v64 = vrot.slane %v63, 1
  %v65 = vadd.f32 %v63, %v64
  %v66 = vmul.f32 %v53, %v53
  %v67 = vmul.f32 %v54, %v54
  %v68 = vmul.f32 %v55, %v55
  %v69 = vmul.f32 %v56, %v56
  %v70 = vadd.f32 %v66, %v67
  %v71 = vadd.f32 %v70, %v68
  %v72 = vadd.f32 %v71, %v69
  %v73 = vrot.slane %v72, 4
  %v74 = vadd.f32 %v72, %v73
  %v75 = vrot.slane %v74, 2
  %v76 = vadd.f32 %v74, %v75
  %v77 = vrot.slane %v76, 1
  %v78 = vadd.f32 %v76, %v77
  %vm79 = vcmask 1040384
  %v80 = vsel %vm79, %v65, %v78
  %81 = vmatprep.subr.mxu0 0.0
  %82 = vmatpush1.msra.mxu0 %v46
  %83 = vmatprep.subr.mxu0 0.0
  %84 = vmatpush1.msra.mxu0 %v45
  %85 = vmatprep.subr.mxu0 0.0
  %86 = vmatpush1.msra.mxu0 %v44
  %87 = vmatprep.subr.mxu0 0.0
  %88 = vmatpush1.msra.mxu0 %v43
  %89 = vmatprep.subr.mxu0 0.0
  %90 = vmatpush1.msra.mxu0 %v42
  %91 = vmatprep.subr.mxu0 0.0
  %92 = vmatpush1.msra.mxu0 %v41
  %93 = vmatprep.subr.mxu0 0.0
  %94 = vmatpush1.msra.mxu0 %v40
  %95 = vmatprep.subr.mxu0 0.0
  %96 = vmatpush1.msra.mxu0 %v39
  %97 = vmatprep.subr.mxu0 0.0
  %98 = vmatpush1.msra.mxu0 %v38
  %99 = vmatprep.subr.mxu0 0.0
  %100 = vmatpush1.msra.mxu0 %v37
  %101 = vmatprep.subr.mxu0 0.0
  %102 = vmatpush1.msra.mxu0 %v36
  %103 = vmatprep.subr.mxu0 0.0
  %104 = vmatpush1.msra.mxu0 %v35
  %105 = vmatprep.subr.mxu0 0.0
  %106 = vmatpush1.msra.mxu0 %v34
  %107 = vmatprep.subr.mxu0 0.0
  %108 = vmatpush1.msra.mxu0 %v33
  %109 = vmatprep.subr.mxu0 0.0
  %110 = vmatpush1.msra.mxu0 %v32
  %111 = vmatprep.subr.mxu0 0.0
  %112 = vmatpush1.msra.mxu0 %v31
  %113 = vmatprep.subr.mxu0 0.0
  %114 = vmatpush2.msra.mxu0 0.0
  %115 = vmatprep.subr.mxu0 0.0
  %116 = vmatpush2.msra.mxu0 0.0
  %117 = vmatprep.subr.mxu0 0.0
  %118 = vmatpush2.msra.mxu0 0.0
  %119 = vmatprep.subr.mxu0 0.0
  %120 = vmatpush2.msra.mxu0 0.0
  %121 = vmatprep.subr.mxu0 0.0
  %122 = vmatpush2.msra.mxu0 0.0
  %123 = vmatprep.subr.mxu0 0.0
  %124 = vmatpush2.msra.mxu0 0.0
  %125 = vmatprep.subr.mxu0 0.0
  %126 = vmatpush2.msra.mxu0 0.0
  %127 = vmatprep.subr.mxu0 0.0
  %128 = vmatpush2.msra.mxu0 0.0
  %129 = vmatprep.subr.mxu0 0.0
  %130 = vmatpush2.msra.mxu0 0.0
  %131 = vmatprep.subr.mxu0 0.0
  %132 = vmatpush2.msra.mxu0 0.0
  %133 = vmatprep.subr.mxu0 0.0
  %134 = vmatpush2.msra.mxu0 0.0
  %135 = vmatprep.subr.mxu0 0.0
  %136 = vmatpush2.msra.mxu0 0.0
  %137 = vmatprep.subr.mxu0 0.0
  %138 = vmatpush2.msra.mxu0 0.0
  %139 = vmatprep.subr.mxu0 0.0
  %140 = vmatpush2.msra.mxu0 0.0
  %141 = vmatprep.subr.mxu0 0.0
  %142 = vmatpush2.msra.mxu0 0.0
  %143 = vmatprep.subr.mxu0 0.0
  %144 = vmatpush2.msra.mxu0 0.0
  %145 = vmatprep.mubr.f32.mxu0 0.0
  %146 = vmatmul.mubr.f32.gmra.mxu0 %v80
  %v147 = vpop.f32.mrf.mxu0
  %v148 = vadd.f32 0.0, %v147
  %v149 = vpop.f32.mrf.mxu0
  %150 = vdwg.mxu0
  %v151 = vmul.f32 %v148, 0.001953125
  %v152 = vmul.f32 %v151, %v151
  %v154 = vrot.slane %v152, 7
  %v156 = vsub.f32 %v151, %v154
  %v157 = vadd.f32 %v156, 1e-05
  %v158 = vrsqrt.pop %v157
  %v161 = vunpack.c.l.s4 1966171168
  %v162 = vunpack.c.0.s8 %v161
  %v163 = vlaneseq
  %v164 = vshrl.u32 %v163, 7
  %v165 = vsub.s32 %v162, %v164
  %v166 = vrot.slane %v158, %v165
  %v167 = vcombine.high %v166, %v166
  %v169 = vunpack.c.l.s4 1966171168
  %v170 = vunpack.c.0.s8 %v169
  %v171 = vlaneseq
  %v172 = vshrl.u32 %v171, 7
  %v173 = vsub.s32 %v170, %v172
  %v174 = vrot.slane %v167, %v173
  %v176 = vmul.f32 %v29, %v174
  %v177 = vmul.f32 %v151, %v176
  %v178 = vsub.f32 %v30, %v177
  %v180 = vlaneseq
  %v181 = vshrl.u32 %v180, 7
  %v182 = vsub.s32 0, %v181
  %v183 = vrot.slane %v176, %v182
  %v185 = vmul.f32 %v53, %v183
  %v186 = vmul.f32 %v54, %v183
  %v187 = vmul.f32 %v55, %v183
  %v188 = vmul.f32 %v56, %v183
  %v190 = vlaneseq
  %v191 = vshrl.u32 %v190, 7
  %v192 = vsub.s32 0, %v191
  %v193 = vrot.slane %v178, %v192
  %v195 = vadd.f32 %v185, %v193
  %v196 = vadd.f32 %v186, %v193
  %v197 = vadd.f32 %v187, %v193
  %v198 = vadd.f32 %v188, %v193
  %v199 = vmax.f32 %v195, 0.0
  %v200 = vmax.f32 %v196, 0.0
  %v201 = vmax.f32 %v197, 0.0
  %v202 = vmax.f32 %v198, 0.0
  %203 = vst [vmem:[#allocation2 + $0x2] sm:$0xff] %v199
  %204 = vst [vmem:[#allocation2 + $0xa] sm:$0xff] %v200
  %205 = vst [vmem:[#allocation2 + $0x1a] sm:$0xff] %v201
  %206 = vst [vmem:[#allocation2 + $0x22] sm:$0xff] %v202
  %v207 = vld [vmem:[#allocation2] sm:$0xff]
  %v208 = vld [vmem:[#allocation2 + $0x8] sm:$0xff]
  %v209 = vld [vmem:[#allocation2 + $0x18] sm:$0xff]
  %v210 = vld [vmem:[#allocation2 + $0x20] sm:$0xff]
  %v211 = vld [vmem:[%s3] sm:$0xff]
  %v212 = vld [vmem:[%s3 + $0x8] sm:$0xff]
  %v213 = vld [vmem:[%s3 + $0x10] sm:$0xff]
  %v214 = vld [vmem:[%s3 + $0x18] sm:$0xff]
  %v215 = vld [vmem:[%s3 + $0x20] sm:$0xff]
  %v216 = vld [vmem:[%s3 + $0x28] sm:$0xff]
  %v217 = vld [vmem:[%s3 + $0x30] sm:$0xff]
  %v218 = vld [vmem:[%s3 + $0x38] sm:$0xff]
  %v219 = vld [vmem:[%s3 + $0x40] sm:$0xff]
  %v220 = vld [vmem:[%s3 + $0x48] sm:$0xff]
  %v221 = vld [vmem:[%s3 + $0x50] sm:$0xff]
  %v222 = vld [vmem:[%s3 + $0x58] sm:$0xff]
  %v223 = vld [vmem:[%s3 + $0x60] sm:$0xff]
  %v224 = vld [vmem:[%s3 + $0x68] sm:$0xff]
  %v225 = vld [vmem:[%s3 + $0x70] sm:$0xff]
  %v226 = vld [vmem:[%s3 + $0x78] sm:$0xff]
  %v227 = vld [vmem:[#allocation2 + $0x1] sm:$0xff]
  %v228 = vld [vmem:[#allocation2 + $0x9] sm:$0xff]
  %v229 = vld [vmem:[#allocation2 + $0x19] sm:$0xff]
  %v230 = vld [vmem:[#allocation2 + $0x21] sm:$0xff]
  %s231 = scalar_lea.vmem %s3, 128
  %v232 = vld [vmem:[%s231] sm:$0xff]
  %v233 = vld [vmem:[%s231 + $0x8] sm:$0xff]
  %v234 = vld [vmem:[%s231 + $0x10] sm:$0xff]
  %v235 = vld [vmem:[%s231 + $0x18] sm:$0xff]
  %v236 = vld [vmem:[%s231 + $0x20] sm:$0xff]
  %v237 = vld [vmem:[%s231 + $0x28] sm:$0xff]
  %v238 = vld [vmem:[%s231 + $0x30] sm:$0xff]
  %v239 = vld [vmem:[%s231 + $0x38] sm:$0xff]
  %v240 = vld [vmem:[%s231 + $0x40] sm:$0xff]
  %v241 = vld [vmem:[%s231 + $0x48] sm:$0xff]
  %v242 = vld [vmem:[%s231 + $0x50] sm:$0xff]
  %v243 = vld [vmem:[%s231 + $0x58] sm:$0xff]
  %v244 = vld [vmem:[%s231 + $0x60] sm:$0xff]
  %v245 = vld [vmem:[%s231 + $0x68] sm:$0xff]
  %v246 = vld [vmem:[%s231 + $0x70] sm:$0xff]
  %v247 = vld [vmem:[%s231 + $0x78] sm:$0xff]
  %248 = vmatprep.subr.mxu0 0.0
  %249 = vmatpush1.msra.mxu0 %v247
  %250 = vmatprep.subr.mxu0 0.0
  %251 = vmatpush1.msra.mxu0 %v246
  %252 = vmatprep.subr.mxu0 0.0
  %253 = vmatpush1.msra.mxu0 %v245
  %254 = vmatprep.subr.mxu0 0.0
  %255 = vmatpush1.msra.mxu0 %v244
  %256 = vmatprep.subr.mxu0 0.0
  %257 = vmatpush1.msra.mxu0 %v243
  %258 = vmatprep.subr.mxu0 0.0
  %259 = vmatpush1.msra.mxu0 %v242
  %260 = vmatprep.subr.mxu0 0.0
  %261 = vmatpush1.msra.mxu0 %v241
  %262 = vmatprep.subr.mxu0 0.0
  %263 = vmatpush1.msra.mxu0 %v240
  %264 = vmatprep.subr.mxu0 0.0
  %265 = vmatpush1.msra.mxu0 %v239
  %266 = vmatprep.subr.mxu0 0.0
  %267 = vmatpush1.msra.mxu0 %v238
  %268 = vmatprep.subr.mxu0 0.0
  %269 = vmatpush1.msra.mxu0 %v237
  %270 = vmatprep.subr.mxu0 0.0
  %271 = vmatpush1.msra.mxu0 %v236
  %272 = vmatprep.subr.mxu0 0.0
  %273 = vmatpush1.msra.mxu0 %v235
  %274 = vmatprep.subr.mxu0 0.0
  %275 = vmatpush1.msra.mxu0 %v234
  %276 = vmatprep.subr.mxu0 0.0
  %277 = vmatpush1.msra.mxu0 %v233
  %278 = vmatprep.subr.mxu0 0.0
  %279 = vmatpush1.msra.mxu0 %v232
  %280 = vmatprep.subr.mxu0 0.0
  %281 = vmatpush2.msra.mxu0 0.0
  %282 = vmatprep.subr.mxu0 0.0
  %283 = vmatpush2.msra.mxu0 0.0
  %284 = vmatprep.subr.mxu0 0.0
  %285 = vmatpush2.msra.mxu0 0.0
  %286 = vmatprep.subr.mxu0 0.0
  %287 = vmatpush2.msra.mxu0 0.0
  %288 = vmatprep.subr.mxu0 0.0
  %289 = vmatpush2.msra.mxu0 0.0
  %290 = vmatprep.subr.mxu0 0.0
  %291 = vmatpush2.msra.mxu0 0.0
  %292 = vmatprep.subr.mxu0 0.0
  %293 = vmatpush2.msra.mxu0 0.0
  %294 = vmatprep.subr.mxu0 0.0
  %295 = vmatpush2.msra.mxu0 0.0
  %296 = vmatprep.subr.mxu0 0.0
  %297 = vmatpush2.msra.mxu0 0.0
  %298 = vmatprep.subr.mxu0 0.0
  %299 = vmatpush2.msra.mxu0 0.0
  %300 = vmatprep.subr.mxu0 0.0
  %301 = vmatpush2.msra.mxu0 0.0
  %302 = vmatprep.subr.mxu0 0.0
  %303 = vmatpush2.msra.mxu0 0.0
  %304 = vmatprep.subr.mxu0 0.0
  %305 = vmatpush2.msra.mxu0 0.0
  %306 = vmatprep.subr.mxu0 0.0
  %307 = vmatpush2.msra.mxu0 0.0
  %308 = vmatprep.subr.mxu0 0.0
  %309 = vmatpush2.msra.mxu0 0.0
  %310 = vmatprep.subr.mxu0 0.0
  %311 = vmatpush2.msra.mxu0 0.0
  %312 = vmatprep.mubr.f32.mxu0 0.0
  %313 = vmatmul.mubr.f32.gmra.mxu0 %v227
  %v314 = vpop.f32.mrf.mxu0
  %v315 = vadd.f32 0.0, %v314
  %v316 = vpop.f32.mrf.mxu0
  %317 = vmatprep.mubr.f32.mxu0 0.0
  %318 = vmatmul.mubr.f32.gmra.mxu0 %v228
  %v319 = vpop.f32.mrf.mxu0
  %v320 = vadd.f32 0.0, %v319
  %v321 = vpop.f32.mrf.mxu0
  %322 = vmatprep.mubr.f32.mxu0 0.0
  %323 = vmatmul.mubr.f32.gmra.mxu0 %v229
  %v324 = vpop.f32.mrf.mxu0
  %v325 = vadd.f32 0.0, %v324
  %v326 = vpop.f32.mrf.mxu0
  %327 = vmatprep.mubr.f32.mxu0 0.0
  %328 = vmatmul.mubr.f32.gmra.mxu0 %v230
  %v329 = vpop.f32.mrf.mxu0
  %v330 = vadd.f32 0.0, %v329
  %v331 = vpop.f32.mrf.mxu0
  %332 = vdwg.mxu0
  %333 = vmatprep.subr.mxu0 0.0
  %334 = vmatpush1.msra.mxu0 %v226
  %335 = vmatprep.subr.mxu0 0.0
  %336 = vmatpush1.msra.mxu0 %v225
  %337 = vmatprep.subr.mxu0 0.0
  %338 = vmatpush1.msra.mxu0 %v224
  %339 = vmatprep.subr.mxu0 0.0
  %340 = vmatpush1.msra.mxu0 %v223
  %341 = vmatprep.subr.mxu0 0.0
  %342 = vmatpush1.msra.mxu0 %v222
  %343 = vmatprep.subr.mxu0 0.0
  %344 = vmatpush1.msra.mxu0 %v221
  %345 = vmatprep.subr.mxu0 0.0
  %346 = vmatpush1.msra.mxu0 %v220
  %347 = vmatprep.subr.mxu0 0.0
  %348 = vmatpush1.msra.mxu0 %v219
  %349 = vmatprep.subr.mxu0 0.0
  %350 = vmatpush1.msra.mxu0 %v218
  %351 = vmatprep.subr.mxu0 0.0
  %352 = vmatpush1.msra.mxu0 %v217
  %353 = vmatprep.subr.mxu0 0.0
  %354 = vmatpush1.msra.mxu0 %v216
  %355 = vmatprep.subr.mxu0 0.0
  %356 = vmatpush1.msra.mxu0 %v215
  %357 = vmatprep.subr.mxu0 0.0
  %358 = vmatpush1.msra.mxu0 %v214
  %359 = vmatprep.subr.mxu0 0.0
  %360 = vmatpush1.msra.mxu0 %v213
  %361 = vmatprep.subr.mxu0 0.0
  %362 = vmatpush1.msra.mxu0 %v212
  %363 = vmatprep.subr.mxu0 0.0
  %364 = vmatpush1.msra.mxu0 %v211
  %365 = vmatprep.subr.mxu0 0.0
  %366 = vmatpush2.msra.mxu0 0.0
  %367 = vmatprep.subr.mxu0 0.0
  %368 = vmatpush2.msra.mxu0 0.0
  %369 = vmatprep.subr.mxu0 0.0
  %370 = vmatpush2.msra.mxu0 0.0
  %371 = vmatprep.subr.mxu0 0.0
  %372 = vmatpush2.msra.mxu0 0.0
  %373 = vmatprep.subr.mxu0 0.0
  %374 = vmatpush2.msra.mxu0 0.0
  %375 = vmatprep.subr.mxu0 0.0
  %376 = vmatpush2.msra.mxu0 0.0
  %377 = vmatprep.subr.mxu0 0.0
  %378 = vmatpush2.msra.mxu0 0.0
  %379 = vmatprep.subr.mxu0 0.0
  %380 = vmatpush2.msra.mxu0 0.0
  %381 = vmatprep.subr.mxu0 0.0
  %382 = vmatpush2.msra.mxu0 0.0
  %383 = vmatprep.subr.mxu0 0.0
  %384 = vmatpush2.msra.mxu0 0.0
  %385 = vmatprep.subr.mxu0 0.0
  %386 = vmatpush2.msra.mxu0 0.0
  %387 = vmatprep.subr.mxu0 0.0
  %388 = vmatpush2.msra.mxu0 0.0
  %389 = vmatprep.subr.mxu0 0.0
  %390 = vmatpush2.msra.mxu0 0.0
  %391 = vmatprep.subr.mxu0 0.0
  %392 = vmatpush2.msra.mxu0 0.0
  %393 = vmatprep.subr.mxu0 0.0
  %394 = vmatpush2.msra.mxu0 0.0
  %395 = vmatprep.subr.mxu0 0.0
  %396 = vmatpush2.msra.mxu0 0.0
  %397 = vmatprep.mubr.f32.mxu0 0.0
  %398 = vmatmul.mubr.f32.gmra.mxu0 %v207
  %v399 = vpop.f32.mrf.mxu0
  %v400 = vadd.f32 %v315, %v399
  %v401 = vpop.f32.mrf.mxu0
  %402 = vmatprep.mubr.f32.mxu0 0.0
  %403 = vmatmul.mubr.f32.gmra.mxu0 %v208
  %v404 = vpop.f32.mrf.mxu0
  %v405 = vadd.f32 %v320, %v404
  %v406 = vpop.f32.mrf.mxu0
  %407 = vmatprep.mubr.f32.mxu0 0.0
  %408 = vmatmul.mubr.f32.gmra.mxu0 %v209
  %v409 = vpop.f32.mrf.mxu0
  %v410 = vadd.f32 %v325, %v409
  %v411 = vpop.f32.mrf.mxu0
  %412 = vmatprep.mubr.f32.mxu0 0.0
  %413 = vmatmul.mubr.f32.gmra.mxu0 %v210
  %v414 = vpop.f32.mrf.mxu0
  %v415 = vadd.f32 %v330, %v414
  %v416 = vpop.f32.mrf.mxu0
  %417 = vdwg.mxu0
  %v418 = vld [vmem:[#allocation2 + $0x2] sm:$0xff]
  %v419 = vld [vmem:[#allocation2 + $0xa] sm:$0xff]
  %v420 = vld [vmem:[#allocation2 + $0x1a] sm:$0xff]
  %v421 = vld [vmem:[#allocation2 + $0x22] sm:$0xff]
  %s422 = scalar_lea.vmem %s3, 256
  %v423 = vld [vmem:[%s422] sm:$0xff]
  %v424 = vld [vmem:[%s422 + $0x8] sm:$0xff]
  %v425 = vld [vmem:[%s422 + $0x10] sm:$0xff]
  %v426 = vld [vmem:[%s422 + $0x18] sm:$0xff]
  %v427 = vld [vmem:[%s422 + $0x20] sm:$0xff]
  %v428 = vld [vmem:[%s422 + $0x28] sm:$0xff]
  %v429 = vld [vmem:[%s422 + $0x30] sm:$0xff]
  %v430 = vld [vmem:[%s422 + $0x38] sm:$0xff]
  %v431 = vld [vmem:[%s422 + $0x40] sm:$0xff]
  %v432 = vld [vmem:[%s422 + $0x48] sm:$0xff]
  %v433 = vld [vmem:[%s422 + $0x50] sm:$0xff]
  %v434 = vld [vmem:[%s422 + $0x58] sm:$0xff]
  %v435 = vld [vmem:[%s422 + $0x60] sm:$0xff]
  %v436 = vld [vmem:[%s422 + $0x68] sm:$0xff]
  %v437 = vld [vmem:[%s422 + $0x70] sm:$0xff]
  %v438 = vld [vmem:[%s422 + $0x78] sm:$0xff]
  %439 = vmatprep.subr.mxu0 0.0
  %440 = vmatpush1.msra.mxu0 %v438
  %441 = vmatprep.subr.mxu0 0.0
  %442 = vmatpush1.msra.mxu0 %v437
  %443 = vmatprep.subr.mxu0 0.0
  %444 = vmatpush1.msra.mxu0 %v436
  %445 = vmatprep.subr.mxu0 0.0
  %446 = vmatpush1.msra.mxu0 %v435
  %447 = vmatprep.subr.mxu0 0.0
  %448 = vmatpush1.msra.mxu0 %v434
  %449 = vmatprep.subr.mxu0 0.0
  %450 = vmatpush1.msra.mxu0 %v433
  %451 = vmatprep.subr.mxu0 0.0
  %452 = vmatpush1.msra.mxu0 %v432
  %453 = vmatprep.subr.mxu0 0.0
  %454 = vmatpush1.msra.mxu0 %v431
  %455 = vmatprep.subr.mxu0 0.0
  %456 = vmatpush1.msra.mxu0 %v430
  %457 = vmatprep.subr.mxu0 0.0
  %458 = vmatpush1.msra.mxu0 %v429
  %459 = vmatprep.subr.mxu0 0.0
  %460 = vmatpush1.msra.mxu0 %v428
  %461 = vmatprep.subr.mxu0 0.0
  %462 = vmatpush1.msra.mxu0 %v427
  %463 = vmatprep.subr.mxu0 0.0
  %464 = vmatpush1.msra.mxu0 %v426
  %465 = vmatprep.subr.mxu0 0.0
  %466 = vmatpush1.msra.mxu0 %v425
  %467 = vmatprep.subr.mxu0 0.0
  %468 = vmatpush1.msra.mxu0 %v424
  %469 = vmatprep.subr.mxu0 0.0
  %470 = vmatpush1.msra.mxu0 %v423
  %471 = vmatprep.subr.mxu0 0.0
  %472 = vmatpush2.msra.mxu0 0.0
  %473 = vmatprep.subr.mxu0 0.0
  %474 = vmatpush2.msra.mxu0 0.0
  %475 = vmatprep.subr.mxu0 0.0
  %476 = vmatpush2.msra.mxu0 0.0
  %477 = vmatprep.subr.mxu0 0.0
  %478 = vmatpush2.msra.mxu0 0.0
  %479 = vmatprep.subr.mxu0 0.0
  %480 = vmatpush2.msra.mxu0 0.0
  %481 = vmatprep.subr.mxu0 0.0
  %482 = vmatpush2.msra.mxu0 0.0
  %483 = vmatprep.subr.mxu0 0.0
  %484 = vmatpush2.msra.mxu0 0.0
  %485 = vmatprep.subr.mxu0 0.0
  %486 = vmatpush2.msra.mxu0 0.0
  %487 = vmatprep.subr.mxu0 0.0
  %488 = vmatpush2.msra.mxu0 0.0
  %489 = vmatprep.subr.mxu0 0.0
  %490 = vmatpush2.msra.mxu0 0.0
  %491 = vmatprep.subr.mxu0 0.0
  %492 = vmatpush2.msra.mxu0 0.0
  %493 = vmatprep.subr.mxu0 0.0
  %494 = vmatpush2.msra.mxu0 0.0
  %495 = vmatprep.subr.mxu0 0.0
  %496 = vmatpush2.msra.mxu0 0.0
  %497 = vmatprep.subr.mxu0 0.0
  %498 = vmatpush2.msra.mxu0 0.0
  %499 = vmatprep.subr.mxu0 0.0
  %500 = vmatpush2.msra.mxu0 0.0
  %501 = vmatprep.subr.mxu0 0.0
  %502 = vmatpush2.msra.mxu0 0.0
  %503 = vmatprep.mubr.f32.mxu0 0.0
  %504 = vmatmul.mubr.f32.gmra.mxu0 %v418
  %v505 = vpop.f32.mrf.mxu0
  %v506 = vadd.f32 0.0, %v505
  %v507 = vpop.f32.mrf.mxu0
  %508 = vmatprep.mubr.f32.mxu0 0.0
  %509 = vmatmul.mubr.f32.gmra.mxu0 %v419
  %v510 = vpop.f32.mrf.mxu0
  %v511 = vadd.f32 0.0, %v510
  %v512 = vpop.f32.mrf.mxu0
  %513 = vmatprep.mubr.f32.mxu0 0.0
  %514 = vmatmul.mubr.f32.gmra.mxu0 %v420
  %v515 = vpop.f32.mrf.mxu0
  %v516 = vadd.f32 0.0, %v515
  %v517 = vpop.f32.mrf.mxu0
  %518 = vmatprep.mubr.f32.mxu0 0.0
  %519 = vmatmul.mubr.f32.gmra.mxu0 %v421
  %v520 = vpop.f32.mrf.mxu0
  %v521 = vadd.f32 0.0, %v520
  %v522 = vpop.f32.mrf.mxu0
  %523 = vdwg.mxu0
  %v524 = vadd.f32 %v400, %v506
  %v525 = vadd.f32 %v405, %v511
  %v526 = vadd.f32 %v410, %v516
  %v527 = vadd.f32 %v415, %v521
  %v528 = vld [vmem:[#allocation2 + $0x3] sm:$0xff]
  %v529 = vld [vmem:[#allocation2 + $0xb] sm:$0xff]
  %v530 = vld [vmem:[#allocation2 + $0x1b] sm:$0xff]
  %v531 = vld [vmem:[#allocation2 + $0x23] sm:$0xff]
  %s532 = scalar_lea.vmem %s3, 384
  %v533 = vld [vmem:[%s532] sm:$0xff]
  %v534 = vld [vmem:[%s532 + $0x8] sm:$0xff]
  %v535 = vld [vmem:[%s532 + $0x10] sm:$0xff]
  %v536 = vld [vmem:[%s532 + $0x18] sm:$0xff]
  %v537 = vld [vmem:[%s532 + $0x20] sm:$0xff]
  %v538 = vld [vmem:[%s532 + $0x28] sm:$0xff]
  %v539 = vld [vmem:[%s532 + $0x30] sm:$0xff]
  %v540 = vld [vmem:[%s532 + $0x38] sm:$0xff]
  %v541 = vld [vmem:[%s532 + $0x40] sm:$0xff]
  %v542 = vld [vmem:[%s532 + $0x48] sm:$0xff]
  %v543 = vld [vmem:[%s532 + $0x50] sm:$0xff]
  %v544 = vld [vmem:[%s532 + $0x58] sm:$0xff]
  %v545 = vld [vmem:[%s532 + $0x60] sm:$0xff]
  %v546 = vld [vmem:[%s532 + $0x68] sm:$0xff]
  %v547 = vld [vmem:[%s532 + $0x70] sm:$0xff]
  %v548 = vld [vmem:[%s532 + $0x78] sm:$0xff]
  %549 = vmatprep.subr.mxu0 0.0
  %550 = vmatpush1.msra.mxu0 %v548
  %551 = vmatprep.subr.mxu0 0.0
  %552 = vmatpush1.msra.mxu0 %v547
  %553 = vmatprep.subr.mxu0 0.0
  %554 = vmatpush1.msra.mxu0 %v546
  %555 = vmatprep.subr.mxu0 0.0
  %556 = vmatpush1.msra.mxu0 %v545
  %557 = vmatprep.subr.mxu0 0.0
  %558 = vmatpush1.msra.mxu0 %v544
  %559 = vmatprep.subr.mxu0 0.0
  %560 = vmatpush1.msra.mxu0 %v543
  %561 = vmatprep.subr.mxu0 0.0
  %562 = vmatpush1.msra.mxu0 %v542
  %563 = vmatprep.subr.mxu0 0.0
  %564 = vmatpush1.msra.mxu0 %v541
  %565 = vmatprep.subr.mxu0 0.0
  %566 = vmatpush1.msra.mxu0 %v540
  %567 = vmatprep.subr.mxu0 0.0
  %568 = vmatpush1.msra.mxu0 %v539
  %569 = vmatprep.subr.mxu0 0.0
  %570 = vmatpush1.msra.mxu0 %v538
  %571 = vmatprep.subr.mxu0 0.0
  %572 = vmatpush1.msra.mxu0 %v537
  %573 = vmatprep.subr.mxu0 0.0
  %574 = vmatpush1.msra.mxu0 %v536
  %575 = vmatprep.subr.mxu0 0.0
  %576 = vmatpush1.msra.mxu0 %v535
  %577 = vmatprep.subr.mxu0 0.0
  %578 = vmatpush1.msra.mxu0 %v534
  %579 = vmatprep.subr.mxu0 0.0
  %580 = vmatpush1.msra.mxu0 %v533
  %581 = vmatprep.subr.mxu0 0.0
  %582 = vmatpush2.msra.mxu0 0.0
  %583 = vmatprep.subr.mxu0 0.0
  %584 = vmatpush2.msra.mxu0 0.0
  %585 = vmatprep.subr.mxu0 0.0
  %586 = vmatpush2.msra.mxu0 0.0
  %587 = vmatprep.subr.mxu0 0.0
  %588 = vmatpush2.msra.mxu0 0.0
  %589 = vmatprep.subr.mxu0 0.0
  %590 = vmatpush2.msra.mxu0 0.0
  %591 = vmatprep.subr.mxu0 0.0
  %592 = vmatpush2.msra.mxu0 0.0
  %593 = vmatprep.subr.mxu0 0.0
  %594 = vmatpush2.msra.mxu0 0.0
  %595 = vmatprep.subr.mxu0 0.0
  %596 = vmatpush2.msra.mxu0 0.0
  %597 = vmatprep.subr.mxu0 0.0
  %598 = vmatpush2.msra.mxu0 0.0
  %599 = vmatprep.subr.mxu0 0.0
  %600 = vmatpush2.msra.mxu0 0.0
  %601 = vmatprep.subr.mxu0 0.0
  %602 = vmatpush2.msra.mxu0 0.0
  %603 = vmatprep.subr.mxu0 0.0
  %604 = vmatpush2.msra.mxu0 0.0
  %605 = vmatprep.subr.mxu0 0.0
  %606 = vmatpush2.msra.mxu0 0.0
  %607 = vmatprep.subr.mxu0 0.0
  %608 = vmatpush2.msra.mxu0 0.0
  %609 = vmatprep.subr.mxu0 0.0
  %610 = vmatpush2.msra.mxu0 0.0
  %611 = vmatprep.subr.mxu0 0.0
  %612 = vmatpush2.msra.mxu0 0.0
  %613 = vmatprep.mubr.f32.mxu0 0.0
  %614 = vmatmul.mubr.f32.gmra.mxu0 %v528
  %v615 = vpop.f32.mrf.mxu0
  %v616 = vadd.f32 0.0, %v615
  %v617 = vpop.f32.mrf.mxu0
  %618 = vmatprep.mubr.f32.mxu0 0.0
  %619 = vmatmul.mubr.f32.gmra.mxu0 %v529
  %v620 = vpop.f32.mrf.mxu0
  %v621 = vadd.f32 0.0, %v620
  %v622 = vpop.f32.mrf.mxu0
  %623 = vmatprep.mubr.f32.mxu0 0.0
  %624 = vmatmul.mubr.f32.gmra.mxu0 %v530
  %v625 = vpop.f32.mrf.mxu0
  %v626 = vadd.f32 0.0, %v625
  %v627 = vpop.f32.mrf.mxu0
  %628 = vmatprep.mubr.f32.mxu0 0.0
  %629 = vmatmul.mubr.f32.gmra.mxu0 %v531
  %v630 = vpop.f32.mrf.mxu0
  %v631 = vadd.f32 0.0, %v630
  %v632 = vpop.f32.mrf.mxu0
  %633 = vdwg.mxu0
  %v634 = vadd.f32 %v524, %v616
  %v635 = vadd.f32 %v525, %v621
  %v636 = vadd.f32 %v526, %v626
  %v637 = vadd.f32 %v527, %v631
  %v638 = vld [vmem:[#allocation2 + $0x4] sm:$0xff]
  %v639 = vld [vmem:[#allocation2 + $0xc] sm:$0xff]
  %v640 = vld [vmem:[#allocation2 + $0x1c] sm:$0xff]
  %v641 = vld [vmem:[#allocation2 + $0x24] sm:$0xff]
  %s642 = scalar_lea.vmem %s3, 512
  %v643 = vld [vmem:[%s642] sm:$0xff]
  %v644 = vld [vmem:[%s642 + $0x8] sm:$0xff]
  %v645 = vld [vmem:[%s642 + $0x10] sm:$0xff]
  %v646 = vld [vmem:[%s642 + $0x18] sm:$0xff]
  %v647 = vld [vmem:[%s642 + $0x20] sm:$0xff]
  %v648 = vld [vmem:[%s642 + $0x28] sm:$0xff]
  %v649 = vld [vmem:[%s642 + $0x30] sm:$0xff]
  %v650 = vld [vmem:[%s642 + $0x38] sm:$0xff]
  %v651 = vld [vmem:[%s642 + $0x40] sm:$0xff]
  %v652 = vld [vmem:[%s642 + $0x48] sm:$0xff]
  %v653 = vld [vmem:[%s642 + $0x50] sm:$0xff]
  %v654 = vld [vmem:[%s642 + $0x58] sm:$0xff]
  %v655 = vld [vmem:[%s642 + $0x60] sm:$0xff]
  %v656 = vld [vmem:[%s642 + $0x68] sm:$0xff]
  %v657 = vld [vmem:[%s642 + $0x70] sm:$0xff]
  %v658 = vld [vmem:[%s642 + $0x78] sm:$0xff]
  %659 = vmatprep.subr.mxu0 0.0
  %660 = vmatpush1.msra.mxu0 %v658
  %661 = vmatprep.subr.mxu0 0.0
  %662 = vmatpush1.msra.mxu0 %v657
  %663 = vmatprep.subr.mxu0 0.0
  %664 = vmatpush1.msra.mxu0 %v656
  %665 = vmatprep.subr.mxu0 0.0
  %666 = vmatpush1.msra.mxu0 %v655
  %667 = vmatprep.subr.mxu0 0.0
  %668 = vmatpush1.msra.mxu0 %v654
  %669 = vmatprep.subr.mxu0 0.0
  %670 = vmatpush1.msra.mxu0 %v653
  %671 = vmatprep.subr.mxu0 0.0
  %672 = vmatpush1.msra.mxu0 %v652
  %673 = vmatprep.subr.mxu0 0.0
  %674 = vmatpush1.msra.mxu0 %v651
  %675 = vmatprep.subr.mxu0 0.0
  %676 = vmatpush1.msra.mxu0 %v650
  %677 = vmatprep.subr.mxu0 0.0
  %678 = vmatpush1.msra.mxu0 %v649
  %679 = vmatprep.subr.mxu0 0.0
  %680 = vmatpush1.msra.mxu0 %v648
  %681 = vmatprep.subr.mxu0 0.0
  %682 = vmatpush1.msra.mxu0 %v647
  %683 = vmatprep.subr.mxu0 0.0
  %684 = vmatpush1.msra.mxu0 %v646
  %685 = vmatprep.subr.mxu0 0.0
  %686 = vmatpush1.msra.mxu0 %v645
  %687 = vmatprep.subr.mxu0 0.0
  %688 = vmatpush1.msra.mxu0 %v644
  %689 = vmatprep.subr.mxu0 0.0
  %690 = vmatpush1.msra.mxu0 %v643
  %691 = vmatprep.subr.mxu0 0.0
  %692 = vmatpush2.msra.mxu0 0.0
  %693 = vmatprep.subr.mxu0 0.0
  %694 = vmatpush2.msra.mxu0 0.0
  %695 = vmatprep.subr.mxu0 0.0
  %696 = vmatpush2.msra.mxu0 0.0
  %697 = vmatprep.subr.mxu0 0.0
  %698 = vmatpush2.msra.mxu0 0.0
  %699 = vmatprep.subr.mxu0 0.0
  %700 = vmatpush2.msra.mxu0 0.0
  %701 = vmatprep.subr.mxu0 0.0
  %702 = vmatpush2.msra.mxu0 0.0
  %703 = vmatprep.subr.mxu0 0.0
  %704 = vmatpush2.msra.mxu0 0.0
  %705 = vmatprep.subr.mxu0 0.0
  %706 = vmatpush2.msra.mxu0 0.0
  %707 = vmatprep.subr.mxu0 0.0
  %708 = vmatpush2.msra.mxu0 0.0
  %709 = vmatprep.subr.mxu0 0.0
  %710 = vmatpush2.msra.mxu0 0.0
  %711 = vmatprep.subr.mxu0 0.0
  %712 = vmatpush2.msra.mxu0 0.0
  %713 = vmatprep.subr.mxu0 0.0
  %714 = vmatpush2.msra.mxu0 0.0
  %715 = vmatprep.subr.mxu0 0.0
  %716 = vmatpush2.msra.mxu0 0.0
  %717 = vmatprep.subr.mxu0 0.0
  %718 = vmatpush2.msra.mxu0 0.0
  %719 = vmatprep.subr.mxu0 0.0
  %720 = vmatpush2.msra.mxu0 0.0
  %721 = vmatprep.subr.mxu0 0.0
  %722 = vmatpush2.msra.mxu0 0.0
  %723 = vmatprep.mubr.f32.mxu0 0.0
  %724 = vmatmul.mubr.f32.gmra.mxu0 %v638
  %v725 = vpop.f32.mrf.mxu0
  %v726 = vadd.f32 0.0, %v725
  %v727 = vpop.f32.mrf.mxu0
  %728 = vmatprep.mubr.f32.mxu0 0.0
  %729 = vmatmul.mubr.f32.gmra.mxu0 %v639
  %v730 = vpop.f32.mrf.mxu0
  %v731 = vadd.f32 0.0, %v730
  %v732 = vpop.f32.mrf.mxu0
  %733 = vmatprep.mubr.f32.mxu0 0.0
  %734 = vmatmul.mubr.f32.gmra.mxu0 %v640
  %v735 = vpop.f32.mrf.mxu0
  %v736 = vadd.f32 0.0, %v735
  %v737 = vpop.f32.mrf.mxu0
  %738 = vmatprep.mubr.f32.mxu0 0.0
  %739 = vmatmul.mubr.f32.gmra.mxu0 %v641
  %v740 = vpop.f32.mrf.mxu0
  %v741 = vadd.f32 0.0, %v740
  %v742 = vpop.f32.mrf.mxu0
  %743 = vdwg.mxu0
  %v744 = vadd.f32 %v634, %v726
  %v745 = vadd.f32 %v635, %v731
  %v746 = vadd.f32 %v636, %v736
  %v747 = vadd.f32 %v637, %v741
  %v748 = vld [vmem:[%s4] sm:$0x1]
  %v750 = vlaneseq
  %v751 = vshrl.u32 %v750, 7
  %v752 = vsub.s32 0, %v751
  %v753 = vrot.slane %v748, %v752
  %v755 = vadd.f32 %v744, %v753
  %v756 = vadd.f32 %v745, %v753
  %v757 = vadd.f32 %v746, %v753
  %v758 = vadd.f32 %v747, %v753
  %v759 = vadd.f32 %v755, %v756
  %v760 = vadd.f32 %v759, %v757
  %v761 = vadd.f32 %v760, %v758
  %v762 = vrot.slane %v761, 4
  %v763 = vadd.f32 %v761, %v762
  %v764 = vrot.slane %v763, 2
  %v765 = vadd.f32 %v763, %v764
  %v766 = vrot.slane %v765, 1
  %v767 = vadd.f32 %v765, %v766
  %v768 = vmul.f32 %v755, %v755
  %v769 = vmul.f32 %v756, %v756
  %v770 = vmul.f32 %v757, %v757
  %v771 = vmul.f32 %v758, %v758
  %v772 = vadd.f32 %v768, %v769
  %v773 = vadd.f32 %v772, %v770
  %v774 = vadd.f32 %v773, %v771
  %v775 = vrot.slane %v774, 4
  %v776 = vadd.f32 %v774, %v775
  %v777 = vrot.slane %v776, 2
  %v778 = vadd.f32 %v776, %v777
  %v779 = vrot.slane %v778, 1
  %v780 = vadd.f32 %v778, %v779
  %v781 = vsel %vm79, %v767, %v780
  %782 = vmatprep.subr.mxu0 0.0
  %783 = vmatpush1.msra.mxu0 %v46
  %784 = vmatprep.subr.mxu0 0.0
  %785 = vmatpush1.msra.mxu0 %v45
  %786 = vmatprep.subr.mxu0 0.0
  %787 = vmatpush1.msra.mxu0 %v44
  %788 = vmatprep.subr.mxu0 0.0
  %789 = vmatpush1.msra.mxu0 %v43
  %790 = vmatprep.subr.mxu0 0.0
  %791 = vmatpush1.msra.mxu0 %v42
  %792 = vmatprep.subr.mxu0 0.0
  %793 = vmatpush1.msra.mxu0 %v41
  %794 = vmatprep.subr.mxu0 0.0
  %795 = vmatpush1.msra.mxu0 %v40
  %796 = vmatprep.subr.mxu0 0.0
  %797 = vmatpush1.msra.mxu0 %v39
  %798 = vmatprep.subr.mxu0 0.0
  %799 = vmatpush1.msra.mxu0 %v38
  %800 = vmatprep.subr.mxu0 0.0
  %801 = vmatpush1.msra.mxu0 %v37
  %802 = vmatprep.subr.mxu0 0.0
  %803 = vmatpush1.msra.mxu0 %v36
  %804 = vmatprep.subr.mxu0 0.0
  %805 = vmatpush1.msra.mxu0 %v35
  %806 = vmatprep.subr.mxu0 0.0
  %807 = vmatpush1.msra.mxu0 %v34
  %808 = vmatprep.subr.mxu0 0.0
  %809 = vmatpush1.msra.mxu0 %v33
  %810 = vmatprep.subr.mxu0 0.0
  %811 = vmatpush1.msra.mxu0 %v32
  %812 = vmatprep.subr.mxu0 0.0
  %813 = vmatpush1.msra.mxu0 %v31
  %814 = vmatprep.subr.mxu0 0.0
  %815 = vmatpush2.msra.mxu0 0.0
  %816 = vmatprep.subr.mxu0 0.0
  %817 = vmatpush2.msra.mxu0 0.0
  %818 = vmatprep.subr.mxu0 0.0
  %819 = vmatpush2.msra.mxu0 0.0
  %820 = vmatprep.subr.mxu0 0.0
  %821 = vmatpush2.msra.mxu0 0.0
  %822 = vmatprep.subr.mxu0 0.0
  %823 = vmatpush2.msra.mxu0 0.0
  %824 = vmatprep.subr.mxu0 0.0
  %825 = vmatpush2.msra.mxu0 0.0
  %826 = vmatprep.subr.mxu0 0.0
  %827 = vmatpush2.msra.mxu0 0.0
  %828 = vmatprep.subr.mxu0 0.0
  %829 = vmatpush2.msra.mxu0 0.0
  %830 = vmatprep.subr.mxu0 0.0
  %831 = vmatpush2.msra.mxu0 0.0
  %832 = vmatprep.subr.mxu0 0.0
  %833 = vmatpush2.msra.mxu0 0.0
  %834 = vmatprep.subr.mxu0 0.0
  %835 = vmatpush2.msra.mxu0 0.0
  %836 = vmatprep.subr.mxu0 0.0
  %837 = vmatpush2.msra.mxu0 0.0
  %838 = vmatprep.subr.mxu0 0.0
  %839 = vmatpush2.msra.mxu0 0.0
  %840 = vmatprep.subr.mxu0 0.0
  %841 = vmatpush2.msra.mxu0 0.0
  %842 = vmatprep.subr.mxu0 0.0
  %843 = vmatpush2.msra.mxu0 0.0
  %844 = vmatprep.subr.mxu0 0.0
  %845 = vmatpush2.msra.mxu0 0.0
  %846 = vmatprep.mubr.f32.mxu0 0.0
  %847 = vmatmul.mubr.f32.gmra.mxu0 %v781
  %v848 = vpop.f32.mrf.mxu0
  %v849 = vadd.f32 0.0, %v848
  %v850 = vpop.f32.mrf.mxu0
  %851 = vdwg.mxu0
  %v852 = vmul.f32 %v849, 0.001953125
  %v853 = vmul.f32 %v852, %v852
  %v855 = vrot.slane %v853, 7
  %v857 = vsub.f32 %v852, %v855
  %v858 = vadd.f32 %v857, 1e-05
  %v859 = vrsqrt.pop %v858
  %v862 = vunpack.c.l.s4 1966171168
  %v863 = vunpack.c.0.s8 %v862
  %v864 = vlaneseq
  %v865 = vshrl.u32 %v864, 7
  %v866 = vsub.s32 %v863, %v865
  %v867 = vrot.slane %v859, %v866
  %v868 = vcombine.high %v867, %v867
  %v870 = vunpack.c.l.s4 1966171168
  %v871 = vunpack.c.0.s8 %v870
  %v872 = vlaneseq
  %v873 = vshrl.u32 %v872, 7
  %v874 = vsub.s32 %v871, %v873
  %v875 = vrot.slane %v868, %v874
  %v877 = vmul.f32 %v29, %v875
  %v878 = vmul.f32 %v852, %v877
  %v879 = vsub.f32 %v30, %v878
  %v881 = vlaneseq
  %v882 = vshrl.u32 %v881, 7
  %v883 = vsub.s32 0, %v882
  %v884 = vrot.slane %v877, %v883
  %v886 = vmul.f32 %v755, %v884
  %v887 = vmul.f32 %v756, %v884
  %v888 = vmul.f32 %v757, %v884
  %v889 = vmul.f32 %v758, %v884
  %v891 = vlaneseq
  %v892 = vshrl.u32 %v891, 7
  %v893 = vsub.s32 0, %v892
  %v894 = vrot.slane %v879, %v893
  %v896 = vadd.f32 %v886, %v894
  %v897 = vadd.f32 %v887, %v894
  %v898 = vadd.f32 %v888, %v894
  %v899 = vadd.f32 %v889, %v894
  %v900 = vmax.f32 %v896, 0.0
  %v901 = vmax.f32 %v897, 0.0
  %v902 = vmax.f32 %v898, 0.0
  %v903 = vmax.f32 %v899, 0.0
  %904 = vst [vmem:[#allocation2 + $0x2] sm:$0xff] %v900
  %905 = vst [vmem:[#allocation2 + $0xa] sm:$0xff] %v901
  %906 = vst [vmem:[#allocation2 + $0x1a] sm:$0xff] %v902
  %907 = vst [vmem:[#allocation2 + $0x22] sm:$0xff] %v903
  %v908 = vld [vmem:[#allocation2] sm:$0xff]
  %v909 = vld [vmem:[#allocation2 + $0x8] sm:$0xff]
  %v910 = vld [vmem:[#allocation2 + $0x18] sm:$0xff]
  %v911 = vld [vmem:[#allocation2 + $0x20] sm:$0xff]
  %v912 = vld [vmem:[%s5] sm:$0xff]
  %v913 = vld [vmem:[%s5 + $0x8] sm:$0xff]
  %v914 = vld [vmem:[%s5 + $0x10] sm:$0xff]
  %v915 = vld [vmem:[%s5 + $0x18] sm:$0xff]
  %v916 = vld [vmem:[%s5 + $0x20] sm:$0xff]
  %v917 = vld [vmem:[%s5 + $0x28] sm:$0xff]
  %v918 = vld [vmem:[%s5 + $0x30] sm:$0xff]
  %v919 = vld [vmem:[%s5 + $0x38] sm:$0xff]
  %v920 = vld [vmem:[%s5 + $0x40] sm:$0xff]
  %v921 = vld [vmem:[%s5 + $0x48] sm:$0xff]
  %v922 = vld [vmem:[%s5 + $0x50] sm:$0xff]
  %v923 = vld [vmem:[%s5 + $0x58] sm:$0xff]
  %v924 = vld [vmem:[%s5 + $0x60] sm:$0xff]
  %v925 = vld [vmem:[%s5 + $0x68] sm:$0xff]
  %v926 = vld [vmem:[%s5 + $0x70] sm:$0xff]
  %v927 = vld [vmem:[%s5 + $0x78] sm:$0xff]
  %v928 = vld [vmem:[#allocation2 + $0x1] sm:$0xff]
  %v929 = vld [vmem:[#allocation2 + $0x9] sm:$0xff]
  %v930 = vld [vmem:[#allocation2 + $0x19] sm:$0xff]
  %v931 = vld [vmem:[#allocation2 + $0x21] sm:$0xff]
  %s932 = scalar_lea.vmem %s5, 128
  %v933 = vld [vmem:[%s932] sm:$0xff]
  %v934 = vld [vmem:[%s932 + $0x8] sm:$0xff]
  %v935 = vld [vmem:[%s932 + $0x10] sm:$0xff]
  %v936 = vld [vmem:[%s932 + $0x18] sm:$0xff]
  %v937 = vld [vmem:[%s932 + $0x20] sm:$0xff]
  %v938 = vld [vmem:[%s932 + $0x28] sm:$0xff]
  %v939 = vld [vmem:[%s932 + $0x30] sm:$0xff]
  %v940 = vld [vmem:[%s932 + $0x38] sm:$0xff]
  %v941 = vld [vmem:[%s932 + $0x40] sm:$0xff]
  %v942 = vld [vmem:[%s932 + $0x48] sm:$0xff]
  %v943 = vld [vmem:[%s932 + $0x50] sm:$0xff]
  %v944 = vld [vmem:[%s932 + $0x58] sm:$0xff]
  %v945 = vld [vmem:[%s932 + $0x60] sm:$0xff]
  %v946 = vld [vmem:[%s932 + $0x68] sm:$0xff]
  %v947 = vld [vmem:[%s932 + $0x70] sm:$0xff]
  %v948 = vld [vmem:[%s932 + $0x78] sm:$0xff]
  %949 = vmatprep.subr.mxu0 0.0
  %950 = vmatpush1.msra.mxu0 %v948
  %951 = vmatprep.subr.mxu0 0.0
  %952 = vmatpush1.msra.mxu0 %v947
  %953 = vmatprep.subr.mxu0 0.0
  %954 = vmatpush1.msra.mxu0 %v946
  %955 = vmatprep.subr.mxu0 0.0
  %956 = vmatpush1.msra.mxu0 %v945
  %957 = vmatprep.subr.mxu0 0.0
  %958 = vmatpush1.msra.mxu0 %v944
  %959 = vmatprep.subr.mxu0 0.0
  %960 = vmatpush1.msra.mxu0 %v943
  %961 = vmatprep.subr.mxu0 0.0
  %962 = vmatpush1.msra.mxu0 %v942
  %963 = vmatprep.subr.mxu0 0.0
  %964 = vmatpush1.msra.mxu0 %v941
  %965 = vmatprep.subr.mxu0 0.0
  %966 = vmatpush1.msra.mxu0 %v940
  %967 = vmatprep.subr.mxu0 0.0
  %968 = vmatpush1.msra.mxu0 %v939
  %969 = vmatprep.subr.mxu0 0.0
  %970 = vmatpush1.msra.mxu0 %v938
  %971 = vmatprep.subr.mxu0 0.0
  %972 = vmatpush1.msra.mxu0 %v937
  %973 = vmatprep.subr.mxu0 0.0
  %974 = vmatpush1.msra.mxu0 %v936
  %975 = vmatprep.subr.mxu0 0.0
  %976 = vmatpush1.msra.mxu0 %v935
  %977 = vmatprep.subr.mxu0 0.0
  %978 = vmatpush1.msra.mxu0 %v934
  %979 = vmatprep.subr.mxu0 0.0
  %980 = vmatpush1.msra.mxu0 %v933
  %981 = vmatprep.subr.mxu0 0.0
  %982 = vmatpush2.msra.mxu0 0.0
  %983 = vmatprep.subr.mxu0 0.0
  %984 = vmatpush2.msra.mxu0 0.0
  %985 = vmatprep.subr.mxu0 0.0
  %986 = vmatpush2.msra.mxu0 0.0
  %987 = vmatprep.subr.mxu0 0.0
  %988 = vmatpush2.msra.mxu0 0.0
  %989 = vmatprep.subr.mxu0 0.0
  %990 = vmatpush2.msra.mxu0 0.0
  %991 = vmatprep.subr.mxu0 0.0
  %992 = vmatpush2.msra.mxu0 0.0
  %993 = vmatprep.subr.mxu0 0.0
  %994 = vmatpush2.msra.mxu0 0.0
  %995 = vmatprep.subr.mxu0 0.0
  %996 = vmatpush2.msra.mxu0 0.0
  %997 = vmatprep.subr.mxu0 0.0
  %998 = vmatpush2.msra.mxu0 0.0
  %999 = vmatprep.subr.mxu0 0.0
  %1000 = vmatpush2.msra.mxu0 0.0
  %1001 = vmatprep.subr.mxu0 0.0
  %1002 = vmatpush2.msra.mxu0 0.0
  %1003 = vmatprep.subr.mxu0 0.0
  %1004 = vmatpush2.msra.mxu0 0.0
  %1005 = vmatprep.subr.mxu0 0.0
  %1006 = vmatpush2.msra.mxu0 0.0
  %1007 = vmatprep.subr.mxu0 0.0
  %1008 = vmatpush2.msra.mxu0 0.0
  %1009 = vmatprep.subr.mxu0 0.0
  %1010 = vmatpush2.msra.mxu0 0.0
  %1011 = vmatprep.subr.mxu0 0.0
  %1012 = vmatpush2.msra.mxu0 0.0
  %1013 = vmatprep.mubr.f32.mxu0 0.0
  %1014 = vmatmul.mubr.f32.gmra.mxu0 %v928
  %v1015 = vpop.f32.mrf.mxu0
  %v1016 = vadd.f32 0.0, %v1015
  %v1017 = vpop.f32.mrf.mxu0
  %1018 = vmatprep.mubr.f32.mxu0 0.0
  %1019 = vmatmul.mubr.f32.gmra.mxu0 %v929
  %v1020 = vpop.f32.mrf.mxu0
  %v1021 = vadd.f32 0.0, %v1020
  %v1022 = vpop.f32.mrf.mxu0
  %1023 = vmatprep.mubr.f32.mxu0 0.0
  %1024 = vmatmul.mubr.f32.gmra.mxu0 %v930
  %v1025 = vpop.f32.mrf.mxu0
  %v1026 = vadd.f32 0.0, %v1025
  %v1027 = vpop.f32.mrf.mxu0
  %1028 = vmatprep.mubr.f32.mxu0 0.0
  %1029 = vmatmul.mubr.f32.gmra.mxu0 %v931
  %v1030 = vpop.f32.mrf.mxu0
  %v1031 = vadd.f32 0.0, %v1030
  %v1032 = vpop.f32.mrf.mxu0
  %1033 = vdwg.mxu0
  %1034 = vmatprep.subr.mxu0 0.0
  %1035 = vmatpush1.msra.mxu0 %v927
  %1036 = vmatprep.subr.mxu0 0.0
  %1037 = vmatpush1.msra.mxu0 %v926
  %1038 = vmatprep.subr.mxu0 0.0
  %1039 = vmatpush1.msra.mxu0 %v925
  %1040 = vmatprep.subr.mxu0 0.0
  %1041 = vmatpush1.msra.mxu0 %v924
  %1042 = vmatprep.subr.mxu0 0.0
  %1043 = vmatpush1.msra.mxu0 %v923
  %1044 = vmatprep.subr.mxu0 0.0
  %1045 = vmatpush1.msra.mxu0 %v922
  %1046 = vmatprep.subr.mxu0 0.0
  %1047 = vmatpush1.msra.mxu0 %v921
  %1048 = vmatprep.subr.mxu0 0.0
  %1049 = vmatpush1.msra.mxu0 %v920
  %1050 = vmatprep.subr.mxu0 0.0
  %1051 = vmatpush1.msra.mxu0 %v919
  %1052 = vmatprep.subr.mxu0 0.0
  %1053 = vmatpush1.msra.mxu0 %v918
  %1054 = vmatprep.subr.mxu0 0.0
  %1055 = vmatpush1.msra.mxu0 %v917
  %1056 = vmatprep.subr.mxu0 0.0
  %1057 = vmatpush1.msra.mxu0 %v916
  %1058 = vmatprep.subr.mxu0 0.0
  %1059 = vmatpush1.msra.mxu0 %v915
  %1060 = vmatprep.subr.mxu0 0.0
  %1061 = vmatpush1.msra.mxu0 %v914
  %1062 = vmatprep.subr.mxu0 0.0
  %1063 = vmatpush1.msra.mxu0 %v913
  %1064 = vmatprep.subr.mxu0 0.0
  %1065 = vmatpush1.msra.mxu0 %v912
  %1066 = vmatprep.subr.mxu0 0.0
  %1067 = vmatpush2.msra.mxu0 0.0
  %1068 = vmatprep.subr.mxu0 0.0
  %1069 = vmatpush2.msra.mxu0 0.0
  %1070 = vmatprep.subr.mxu0 0.0
  %1071 = vmatpush2.msra.mxu0 0.0
  %1072 = vmatprep.subr.mxu0 0.0
  %1073 = vmatpush2.msra.mxu0 0.0
  %1074 = vmatprep.subr.mxu0 0.0
  %1075 = vmatpush2.msra.mxu0 0.0
  %1076 = vmatprep.subr.mxu0 0.0
  %1077 = vmatpush2.msra.mxu0 0.0
  %1078 = vmatprep.subr.mxu0 0.0
  %1079 = vmatpush2.msra.mxu0 0.0
  %1080 = vmatprep.subr.mxu0 0.0
  %1081 = vmatpush2.msra.mxu0 0.0
  %1082 = vmatprep.subr.mxu0 0.0
  %1083 = vmatpush2.msra.mxu0 0.0
  %1084 = vmatprep.subr.mxu0 0.0
  %1085 = vmatpush2.msra.mxu0 0.0
  %1086 = vmatprep.subr.mxu0 0.0
  %1087 = vmatpush2.msra.mxu0 0.0
  %1088 = vmatprep.subr.mxu0 0.0
  %1089 = vmatpush2.msra.mxu0 0.0
  %1090 = vmatprep.subr.mxu0 0.0
  %1091 = vmatpush2.msra.mxu0 0.0
  %1092 = vmatprep.subr.mxu0 0.0
  %1093 = vmatpush2.msra.mxu0 0.0
  %1094 = vmatprep.subr.mxu0 0.0
  %1095 = vmatpush2.msra.mxu0 0.0
  %1096 = vmatprep.subr.mxu0 0.0
  %1097 = vmatpush2.msra.mxu0 0.0
  %1098 = vmatprep.mubr.f32.mxu0 0.0
  %1099 = vmatmul.mubr.f32.gmra.mxu0 %v908
  %v1100 = vpop.f32.mrf.mxu0
  %v1101 = vadd.f32 %v1016, %v1100
  %v1102 = vpop.f32.mrf.mxu0
  %1103 = vmatprep.mubr.f32.mxu0 0.0
  %1104 = vmatmul.mubr.f32.gmra.mxu0 %v909
  %v1105 = vpop.f32.mrf.mxu0
  %v1106 = vadd.f32 %v1021, %v1105
  %v1107 = vpop.f32.mrf.mxu0
  %1108 = vmatprep.mubr.f32.mxu0 0.0
  %1109 = vmatmul.mubr.f32.gmra.mxu0 %v910
  %v1110 = vpop.f32.mrf.mxu0
  %v1111 = vadd.f32 %v1026, %v1110
  %v1112 = vpop.f32.mrf.mxu0
  %1113 = vmatprep.mubr.f32.mxu0 0.0
  %1114 = vmatmul.mubr.f32.gmra.mxu0 %v911
  %v1115 = vpop.f32.mrf.mxu0
  %v1116 = vadd.f32 %v1031, %v1115
  %v1117 = vpop.f32.mrf.mxu0
  %1118 = vdwg.mxu0
  %v1119 = vld [vmem:[#allocation2 + $0x2] sm:$0xff]
  %v1120 = vld [vmem:[#allocation2 + $0xa] sm:$0xff]
  %v1121 = vld [vmem:[#allocation2 + $0x1a] sm:$0xff]
  %v1122 = vld [vmem:[#allocation2 + $0x22] sm:$0xff]
  %s1123 = scalar_lea.vmem %s5, 256
  %v1124 = vld [vmem:[%s1123] sm:$0xff]
  %v1125 = vld [vmem:[%s1123 + $0x8] sm:$0xff]
  %v1126 = vld [vmem:[%s1123 + $0x10] sm:$0xff]
  %v1127 = vld [vmem:[%s1123 + $0x18] sm:$0xff]
  %v1128 = vld [vmem:[%s1123 + $0x20] sm:$0xff]
  %v1129 = vld [vmem:[%s1123 + $0x28] sm:$0xff]
  %v1130 = vld [vmem:[%s1123 + $0x30] sm:$0xff]
  %v1131 = vld [vmem:[%s1123 + $0x38] sm:$0xff]
  %v1132 = vld [vmem:[%s1123 + $0x40] sm:$0xff]
  %v1133 = vld [vmem:[%s1123 + $0x48] sm:$0xff]
  %v1134 = vld [vmem:[%s1123 + $0x50] sm:$0xff]
  %v1135 = vld [vmem:[%s1123 + $0x58] sm:$0xff]
  %v1136 = vld [vmem:[%s1123 + $0x60] sm:$0xff]
  %v1137 = vld [vmem:[%s1123 + $0x68] sm:$0xff]
  %v1138 = vld [vmem:[%s1123 + $0x70] sm:$0xff]
  %v1139 = vld [vmem:[%s1123 + $0x78] sm:$0xff]
  %1140 = vmatprep.subr.mxu0 0.0
  %1141 = vmatpush1.msra.mxu0 %v1139
  %1142 = vmatprep.subr.mxu0 0.0
  %1143 = vmatpush1.msra.mxu0 %v1138
  %1144 = vmatprep.subr.mxu0 0.0
  %1145 = vmatpush1.msra.mxu0 %v1137
  %1146 = vmatprep.subr.mxu0 0.0
  %1147 = vmatpush1.msra.mxu0 %v1136
  %1148 = vmatprep.subr.mxu0 0.0
  %1149 = vmatpush1.msra.mxu0 %v1135
  %1150 = vmatprep.subr.mxu0 0.0
  %1151 = vmatpush1.msra.mxu0 %v1134
  %1152 = vmatprep.subr.mxu0 0.0
  %1153 = vmatpush1.msra.mxu0 %v1133
  %1154 = vmatprep.subr.mxu0 0.0
  %1155 = vmatpush1.msra.mxu0 %v1132
  %1156 = vmatprep.subr.mxu0 0.0
  %1157 = vmatpush1.msra.mxu0 %v1131
  %1158 = vmatprep.subr.mxu0 0.0
  %1159 = vmatpush1.msra.mxu0 %v1130
  %1160 = vmatprep.subr.mxu0 0.0
  %1161 = vmatpush1.msra.mxu0 %v1129
  %1162 = vmatprep.subr.mxu0 0.0
  %1163 = vmatpush1.msra.mxu0 %v1128
  %1164 = vmatprep.subr.mxu0 0.0
  %1165 = vmatpush1.msra.mxu0 %v1127
  %1166 = vmatprep.subr.mxu0 0.0
  %1167 = vmatpush1.msra.mxu0 %v1126
  %1168 = vmatprep.subr.mxu0 0.0
  %1169 = vmatpush1.msra.mxu0 %v1125
  %1170 = vmatprep.subr.mxu0 0.0
  %1171 = vmatpush1.msra.mxu0 %v1124
  %1172 = vmatprep.subr.mxu0 0.0
  %1173 = vmatpush2.msra.mxu0 0.0
  %1174 = vmatprep.subr.mxu0 0.0
  %1175 = vmatpush2.msra.mxu0 0.0
  %1176 = vmatprep.subr.mxu0 0.0
  %1177 = vmatpush2.msra.mxu0 0.0
  %1178 = vmatprep.subr.mxu0 0.0
  %1179 = vmatpush2.msra.mxu0 0.0
  %1180 = vmatprep.subr.mxu0 0.0
  %1181 = vmatpush2.msra.mxu0 0.0
  %1182 = vmatprep.subr.mxu0 0.0
  %1183 = vmatpush2.msra.mxu0 0.0
  %1184 = vmatprep.subr.mxu0 0.0
  %1185 = vmatpush2.msra.mxu0 0.0
  %1186 = vmatprep.subr.mxu0 0.0
  %1187 = vmatpush2.msra.mxu0 0.0
  %1188 = vmatprep.subr.mxu0 0.0
  %1189 = vmatpush2.msra.mxu0 0.0
  %1190 = vmatprep.subr.mxu0 0.0
  %1191 = vmatpush2.msra.mxu0 0.0
  %1192 = vmatprep.subr.mxu0 0.0
  %1193 = vmatpush2.msra.mxu0 0.0
  %1194 = vmatprep.subr.mxu0 0.0
  %1195 = vmatpush2.msra.mxu0 0.0
  %1196 = vmatprep.subr.mxu0 0.0
  %1197 = vmatpush2.msra.mxu0 0.0
  %1198 = vmatprep.subr.mxu0 0.0
  %1199 = vmatpush2.msra.mxu0 0.0
  %1200 = vmatprep.subr.mxu0 0.0
  %1201 = vmatpush2.msra.mxu0 0.0
  %1202 = vmatprep.subr.mxu0 0.0
  %1203 = vmatpush2.msra.mxu0 0.0
  %1204 = vmatprep.mubr.f32.mxu0 0.0
  %1205 = vmatmul.mubr.f32.gmra.mxu0 %v1119
  %v1206 = vpop.f32.mrf.mxu0
  %v1207 = vadd.f32 0.0, %v1206
  %v1208 = vpop.f32.mrf.mxu0
  %1209 = vmatprep.mubr.f32.mxu0 0.0
  %1210 = vmatmul.mubr.f32.gmra.mxu0 %v1120
  %v1211 = vpop.f32.mrf.mxu0
  %v1212 = vadd.f32 0.0, %v1211
  %v1213 = vpop.f32.mrf.mxu0
  %1214 = vmatprep.mubr.f32.mxu0 0.0
  %1215 = vmatmul.mubr.f32.gmra.mxu0 %v1121
  %v1216 = vpop.f32.mrf.mxu0
  %v1217 = vadd.f32 0.0, %v1216
  %v1218 = vpop.f32.mrf.mxu0
  %1219 = vmatprep.mubr.f32.mxu0 0.0
  %1220 = vmatmul.mubr.f32.gmra.mxu0 %v1122
  %v1221 = vpop.f32.mrf.mxu0
  %v1222 = vadd.f32 0.0, %v1221
  %v1223 = vpop.f32.mrf.mxu0
  %1224 = vdwg.mxu0
  %v1225 = vadd.f32 %v1101, %v1207
  %v1226 = vadd.f32 %v1106, %v1212
  %v1227 = vadd.f32 %v1111, %v1217
  %v1228 = vadd.f32 %v1116, %v1222
  %v1229 = vld [vmem:[#allocation2 + $0x3] sm:$0xff]
  %v1230 = vld [vmem:[#allocation2 + $0xb] sm:$0xff]
  %v1231 = vld [vmem:[#allocation2 + $0x1b] sm:$0xff]
  %v1232 = vld [vmem:[#allocation2 + $0x23] sm:$0xff]
  %s1233 = scalar_lea.vmem %s5, 384
  %v1234 = vld [vmem:[%s1233] sm:$0xff]
  %v1235 = vld [vmem:[%s1233 + $0x8] sm:$0xff]
  %v1236 = vld [vmem:[%s1233 + $0x10] sm:$0xff]
  %v1237 = vld [vmem:[%s1233 + $0x18] sm:$0xff]
  %v1238 = vld [vmem:[%s1233 + $0x20] sm:$0xff]
  %v1239 = vld [vmem:[%s1233 + $0x28] sm:$0xff]
  %v1240 = vld [vmem:[%s1233 + $0x30] sm:$0xff]
  %v1241 = vld [vmem:[%s1233 + $0x38] sm:$0xff]
  %v1242 = vld [vmem:[%s1233 + $0x40] sm:$0xff]
  %v1243 = vld [vmem:[%s1233 + $0x48] sm:$0xff]
  %v1244 = vld [vmem:[%s1233 + $0x50] sm:$0xff]
  %v1245 = vld [vmem:[%s1233 + $0x58] sm:$0xff]
  %v1246 = vld [vmem:[%s1233 + $0x60] sm:$0xff]
  %v1247 = vld [vmem:[%s1233 + $0x68] sm:$0xff]
  %v1248 = vld [vmem:[%s1233 + $0x70] sm:$0xff]
  %v1249 = vld [vmem:[%s1233 + $0x78] sm:$0xff]
  %1250 = vmatprep.subr.mxu0 0.0
  %1251 = vmatpush1.msra.mxu0 %v1249
  %1252 = vmatprep.subr.mxu0 0.0
  %1253 = vmatpush1.msra.mxu0 %v1248
  %1254 = vmatprep.subr.mxu0 0.0
  %1255 = vmatpush1.msra.mxu0 %v1247
  %1256 = vmatprep.subr.mxu0 0.0
  %1257 = vmatpush1.msra.mxu0 %v1246
  %1258 = vmatprep.subr.mxu0 0.0
  %1259 = vmatpush1.msra.mxu0 %v1245
  %1260 = vmatprep.subr.mxu0 0.0
  %1261 = vmatpush1.msra.mxu0 %v1244
  %1262 = vmatprep.subr.mxu0 0.0
  %1263 = vmatpush1.msra.mxu0 %v1243
  %1264 = vmatprep.subr.mxu0 0.0
  %1265 = vmatpush1.msra.mxu0 %v1242
  %1266 = vmatprep.subr.mxu0 0.0
  %1267 = vmatpush1.msra.mxu0 %v1241
  %1268 = vmatprep.subr.mxu0 0.0
  %1269 = vmatpush1.msra.mxu0 %v1240
  %1270 = vmatprep.subr.mxu0 0.0
  %1271 = vmatpush1.msra.mxu0 %v1239
  %1272 = vmatprep.subr.mxu0 0.0
  %1273 = vmatpush1.msra.mxu0 %v1238
  %1274 = vmatprep.subr.mxu0 0.0
  %1275 = vmatpush1.msra.mxu0 %v1237
  %1276 = vmatprep.subr.mxu0 0.0
  %1277 = vmatpush1.msra.mxu0 %v1236
  %1278 = vmatprep.subr.mxu0 0.0
  %1279 = vmatpush1.msra.mxu0 %v1235
  %1280 = vmatprep.subr.mxu0 0.0
  %1281 = vmatpush1.msra.mxu0 %v1234
  %1282 = vmatprep.subr.mxu0 0.0
  %1283 = vmatpush2.msra.mxu0 0.0
  %1284 = vmatprep.subr.mxu0 0.0
  %1285 = vmatpush2.msra.mxu0 0.0
  %1286 = vmatprep.subr.mxu0 0.0
  %1287 = vmatpush2.msra.mxu0 0.0
  %1288 = vmatprep.subr.mxu0 0.0
  %1289 = vmatpush2.msra.mxu0 0.0
  %1290 = vmatprep.subr.mxu0 0.0
  %1291 = vmatpush2.msra.mxu0 0.0
  %1292 = vmatprep.subr.mxu0 0.0
  %1293 = vmatpush2.msra.mxu0 0.0
  %1294 = vmatprep.subr.mxu0 0.0
  %1295 = vmatpush2.msra.mxu0 0.0
  %1296 = vmatprep.subr.mxu0 0.0
  %1297 = vmatpush2.msra.mxu0 0.0
  %1298 = vmatprep.subr.mxu0 0.0
  %1299 = vmatpush2.msra.mxu0 0.0
  %1300 = vmatprep.subr.mxu0 0.0
  %1301 = vmatpush2.msra.mxu0 0.0
  %1302 = vmatprep.subr.mxu0 0.0
  %1303 = vmatpush2.msra.mxu0 0.0
  %1304 = vmatprep.subr.mxu0 0.0
  %1305 = vmatpush2.msra.mxu0 0.0
  %1306 = vmatprep.subr.mxu0 0.0
  %1307 = vmatpush2.msra.mxu0 0.0
  %1308 = vmatprep.subr.mxu0 0.0
  %1309 = vmatpush2.msra.mxu0 0.0
  %1310 = vmatprep.subr.mxu0 0.0
  %1311 = vmatpush2.msra.mxu0 0.0
  %1312 = vmatprep.subr.mxu0 0.0
  %1313 = vmatpush2.msra.mxu0 0.0
  %1314 = vmatprep.mubr.f32.mxu0 0.0
  %1315 = vmatmul.mubr.f32.gmra.mxu0 %v1229
  %v1316 = vpop.f32.mrf.mxu0
  %v1317 = vadd.f32 0.0, %v1316
  %v1318 = vpop.f32.mrf.mxu0
  %1319 = vmatprep.mubr.f32.mxu0 0.0
  %1320 = vmatmul.mubr.f32.gmra.mxu0 %v1230
  %v1321 = vpop.f32.mrf.mxu0
  %v1322 = vadd.f32 0.0, %v1321
  %v1323 = vpop.f32.mrf.mxu0
  %1324 = vmatprep.mubr.f32.mxu0 0.0
  %1325 = vmatmul.mubr.f32.gmra.mxu0 %v1231
  %v1326 = vpop.f32.mrf.mxu0
  %v1327 = vadd.f32 0.0, %v1326
  %v1328 = vpop.f32.mrf.mxu0
  %1329 = vmatprep.mubr.f32.mxu0 0.0
  %1330 = vmatmul.mubr.f32.gmra.mxu0 %v1232
  %v1331 = vpop.f32.mrf.mxu0
  %v1332 = vadd.f32 0.0, %v1331
  %v1333 = vpop.f32.mrf.mxu0
  %1334 = vdwg.mxu0
  %v1335 = vadd.f32 %v1225, %v1317
  %v1336 = vadd.f32 %v1226, %v1322
  %v1337 = vadd.f32 %v1227, %v1327
  %v1338 = vadd.f32 %v1228, %v1332
  %v1339 = vld [vmem:[#allocation2 + $0x4] sm:$0xff]
  %v1340 = vld [vmem:[#allocation2 + $0xc] sm:$0xff]
  %v1341 = vld [vmem:[#allocation2 + $0x1c] sm:$0xff]
  %v1342 = vld [vmem:[#allocation2 + $0x24] sm:$0xff]
  %s1343 = scalar_lea.vmem %s5, 512
  %v1344 = vld [vmem:[%s1343] sm:$0xff]
  %v1345 = vld [vmem:[%s1343 + $0x8] sm:$0xff]
  %v1346 = vld [vmem:[%s1343 + $0x10] sm:$0xff]
  %v1347 = vld [vmem:[%s1343 + $0x18] sm:$0xff]
  %v1348 = vld [vmem:[%s1343 + $0x20] sm:$0xff]
  %v1349 = vld [vmem:[%s1343 + $0x28] sm:$0xff]
  %v1350 = vld [vmem:[%s1343 + $0x30] sm:$0xff]
  %v1351 = vld [vmem:[%s1343 + $0x38] sm:$0xff]
  %v1352 = vld [vmem:[%s1343 + $0x40] sm:$0xff]
  %v1353 = vld [vmem:[%s1343 + $0x48] sm:$0xff]
  %v1354 = vld [vmem:[%s1343 + $0x50] sm:$0xff]
  %v1355 = vld [vmem:[%s1343 + $0x58] sm:$0xff]
  %v1356 = vld [vmem:[%s1343 + $0x60] sm:$0xff]
  %v1357 = vld [vmem:[%s1343 + $0x68] sm:$0xff]
  %v1358 = vld [vmem:[%s1343 + $0x70] sm:$0xff]
  %v1359 = vld [vmem:[%s1343 + $0x78] sm:$0xff]
  %1360 = vmatprep.subr.mxu0 0.0
  %1361 = vmatpush1.msra.mxu0 %v1359
  %1362 = vmatprep.subr.mxu0 0.0
  %1363 = vmatpush1.msra.mxu0 %v1358
  %1364 = vmatprep.subr.mxu0 0.0
  %1365 = vmatpush1.msra.mxu0 %v1357
  %1366 = vmatprep.subr.mxu0 0.0
  %1367 = vmatpush1.msra.mxu0 %v1356
  %1368 = vmatprep.subr.mxu0 0.0
  %1369 = vmatpush1.msra.mxu0 %v1355
  %1370 = vmatprep.subr.mxu0 0.0
  %1371 = vmatpush1.msra.mxu0 %v1354
  %1372 = vmatprep.subr.mxu0 0.0
  %1373 = vmatpush1.msra.mxu0 %v1353
  %1374 = vmatprep.subr.mxu0 0.0
  %1375 = vmatpush1.msra.mxu0 %v1352
  %1376 = vmatprep.subr.mxu0 0.0
  %1377 = vmatpush1.msra.mxu0 %v1351
  %1378 = vmatprep.subr.mxu0 0.0
  %1379 = vmatpush1.msra.mxu0 %v1350
  %1380 = vmatprep.subr.mxu0 0.0
  %1381 = vmatpush1.msra.mxu0 %v1349
  %1382 = vmatprep.subr.mxu0 0.0
  %1383 = vmatpush1.msra.mxu0 %v1348
  %1384 = vmatprep.subr.mxu0 0.0
  %1385 = vmatpush1.msra.mxu0 %v1347
  %1386 = vmatprep.subr.mxu0 0.0
  %1387 = vmatpush1.msra.mxu0 %v1346
  %1388 = vmatprep.subr.mxu0 0.0
  %1389 = vmatpush1.msra.mxu0 %v1345
  %1390 = vmatprep.subr.mxu0 0.0
  %1391 = vmatpush1.msra.mxu0 %v1344
  %1392 = vmatprep.subr.mxu0 0.0
  %1393 = vmatpush2.msra.mxu0 0.0
  %1394 = vmatprep.subr.mxu0 0.0
  %1395 = vmatpush2.msra.mxu0 0.0
  %1396 = vmatprep.subr.mxu0 0.0
  %1397 = vmatpush2.msra.mxu0 0.0
  %1398 = vmatprep.subr.mxu0 0.0
  %1399 = vmatpush2.msra.mxu0 0.0
  %1400 = vmatprep.subr.mxu0 0.0
  %1401 = vmatpush2.msra.mxu0 0.0
  %1402 = vmatprep.subr.mxu0 0.0
  %1403 = vmatpush2.msra.mxu0 0.0
  %1404 = vmatprep.subr.mxu0 0.0
  %1405 = vmatpush2.msra.mxu0 0.0
  %1406 = vmatprep.subr.mxu0 0.0
  %1407 = vmatpush2.msra.mxu0 0.0
  %1408 = vmatprep.subr.mxu0 0.0
  %1409 = vmatpush2.msra.mxu0 0.0
  %1410 = vmatprep.subr.mxu0 0.0
  %1411 = vmatpush2.msra.mxu0 0.0
  %1412 = vmatprep.subr.mxu0 0.0
  %1413 = vmatpush2.msra.mxu0 0.0
  %1414 = vmatprep.subr.mxu0 0.0
  %1415 = vmatpush2.msra.mxu0 0.0
  %1416 = vmatprep.subr.mxu0 0.0
  %1417 = vmatpush2.msra.mxu0 0.0
  %1418 = vmatprep.subr.mxu0 0.0
  %1419 = vmatpush2.msra.mxu0 0.0
  %1420 = vmatprep.subr.mxu0 0.0
  %1421 = vmatpush2.msra.mxu0 0.0
  %1422 = vmatprep.subr.mxu0 0.0
  %1423 = vmatpush2.msra.mxu0 0.0
  %1424 = vmatprep.mubr.f32.mxu0 0.0
  %1425 = vmatmul.mubr.f32.gmra.mxu0 %v1339
  %v1426 = vpop.f32.mrf.mxu0
  %v1427 = vadd.f32 0.0, %v1426
  %v1428 = vpop.f32.mrf.mxu0
  %1429 = vmatprep.mubr.f32.mxu0 0.0
  %1430 = vmatmul.mubr.f32.gmra.mxu0 %v1340
  %v1431 = vpop.f32.mrf.mxu0
  %v1432 = vadd.f32 0.0, %v1431
  %v1433 = vpop.f32.mrf.mxu0
  %1434 = vmatprep.mubr.f32.mxu0 0.0
  %1435 = vmatmul.mubr.f32.gmra.mxu0 %v1341
  %v1436 = vpop.f32.mrf.mxu0
  %v1437 = vadd.f32 0.0, %v1436
  %v1438 = vpop.f32.mrf.mxu0
  %1439 = vmatprep.mubr.f32.mxu0 0.0
  %1440 = vmatmul.mubr.f32.gmra.mxu0 %v1342
  %v1441 = vpop.f32.mrf.mxu0
  %v1442 = vadd.f32 0.0, %v1441
  %v1443 = vpop.f32.mrf.mxu0
  %1444 = vdwg.mxu0
  %v1445 = vadd.f32 %v1335, %v1427
  %v1446 = vadd.f32 %v1336, %v1432
  %v1447 = vadd.f32 %v1337, %v1437
  %v1448 = vadd.f32 %v1338, %v1442
  %v1449 = vld [vmem:[%s6] sm:$0x1]
  %v1451 = vlaneseq
  %v1452 = vshrl.u32 %v1451, 7
  %v1453 = vsub.s32 0, %v1452
  %v1454 = vrot.slane %v1449, %v1453
  %v1456 = vadd.f32 %v1445, %v1454
  %v1457 = vadd.f32 %v1446, %v1454
  %v1458 = vadd.f32 %v1447, %v1454
  %v1459 = vadd.f32 %v1448, %v1454
  %v1460 = vld [vmem:[%s0] sm:$0xff]
  %v1461 = vld [vmem:[%s0 + $0x8] sm:$0xff]
  %v1462 = vld [vmem:[%s0 + $0x10] sm:$0xff]
  %v1463 = vld [vmem:[%s0 + $0x18] sm:$0xff]
  %v1464 = vadd.f32 %v1460, %v1456
  %v1465 = vadd.f32 %v1461, %v1457
  %v1466 = vadd.f32 %v1462, %v1458
  %v1467 = vadd.f32 %v1463, %v1459
  %1468 = vst [vmem:[%s8] sm:$0xff] %v1464
  %1469 = vst [vmem:[%s8 + $0x8] sm:$0xff] %v1465
  %1470 = vst [vmem:[%s8 + $0x10] sm:$0xff] %v1466
  %1471 = vst [vmem:[%s8 + $0x18] sm:$0xff] %v1467
  // Predicated region
  $region34: #{resnet_forward.1} parent=0 // pred_check
    _
  $region35: #{resnet_forward.1} parent=0 // pred_check_branch
    %1473 = sbr.rel (0) target = $region37
  $region36: #{resnet_forward.1} parent=0 // pred_region
    _
  $region37: #{resnet_forward.1} parent=0 // pred_fallthru
    _
  // Predicated region
  $region38: #{resnet_forward.1} parent=0 // pred_check
    _
  $region39: #{resnet_forward.1} parent=0 // pred_check_branch
    %1475 = sbr.rel (0) target = $region41
  $region40: #{resnet_forward.1} parent=0 // pred_region
    _
  $region41: #{resnet_forward.1} parent=0 // pred_fallthru
    _

</llo_original>
